<compile_context>
chip_gen: v5e
topology: v5e:2x2
jax: 0.10.0
libtpu: 0.0.40
codegen_flags: <defaults>
</compile_context>

<pallas_src>
import numpy as np
import jax
import jax.numpy as jnp
from jax import lax
from jax.experimental import pallas as pl
from jax.experimental.pallas import tpu as pltpu

# ---- small, module-consistent sizes ----
N = 2                    # batch
NMELS = 16               # n_mels (divisible by 4, as the module assumes)
TFRAMES = 16             # time_frames (divisible by 4)
NCLASS = 4               # num_classes

H1, W1 = NMELS, TFRAMES          # 16, 16  (conv1 output resolution)
H2, W2 = H1 // 2, W1 // 2        # 8, 8    (after pool1)
H3, W3 = H2 // 2, W2 // 2        # 4, 4    (after pool2)
C1, C2 = 16, 32                  # conv channels
FC1_OUT = 64
FCPAD = 128                      # fc widths / logits padded to a full vreg lane
FCIN = H3 * W3 * C2              # 512
BN_EPS = 1e-5

BT = 8                           # batch tile (multiple of 8 -> sublane-dense M)
R1 = BT * H1                     # 128 rows per tile at conv1 resolution
R2 = BT * H2                     # 64
R3 = BT * H3                     # 32
HALF1 = W2 * C1                  # 128 lanes per w-parity half (conv1 stage)
HALF2 = W3 * C2                  # 128 lanes per w-parity half (conv2 stage)

assert NMELS % 4 == 0 and TFRAMES % 4 == 0
assert HALF1 == 128 and HALF2 == 128 and BT % 8 == 0


# --------------------------- kernel ---------------------------

def cnn_kernel(x_ref, sh1_ref, w1b_ref, b1t_ref, sh2_ref, w2b_ref, b2t_ref,
               pe1_ref, pe2_ref, fw1_ref, fb1_ref, fw2_ref, fb2_ref, out_ref):
    f32 = jnp.float32
    x = x_ref[...]                                                     # (R1, W1)

    # ---- conv1 (+folded BN1): vertical taps via shift matmuls, horizontal taps +
    #      zero-padding + W-pool column layout folded into the banded weights ----
    xu = jnp.dot(sh1_ref[pl.ds(0, R1), :], x, preferred_element_type=f32)    # row h-1
    xd = jnp.dot(sh1_ref[pl.ds(R1, R1), :], x, preferred_element_type=f32)   # row h+1
    acc1 = jnp.dot(xu, w1b_ref[pl.ds(0, W1), :], preferred_element_type=f32)
    acc1 = acc1 + jnp.dot(x, w1b_ref[pl.ds(W1, W1), :], preferred_element_type=f32)
    acc1 = acc1 + jnp.dot(xd, w1b_ref[pl.ds(2 * W1, W1), :], preferred_element_type=f32)
    # W-half of maxpool1: lanes [0:128] = even w, [128:256] = odd w (vreg-aligned).
    # Per-channel bias + ReLU commute with the max.
    h1 = jnp.maximum(jnp.maximum(acc1[:, :HALF1], acc1[:, HALF1:]) + b1t_ref[...], 0.0)

    # ---- H-half of maxpool1: even/odd row selection on the MXU ----
    p1 = jnp.maximum(
        jnp.dot(pe1_ref[pl.ds(0, R2), :], h1, preferred_element_type=f32),
        jnp.dot(pe1_ref[pl.ds(R2, R2), :], h1, preferred_element_type=f32))   # (R2, 128)

    # ---- conv2 (+folded BN2), same structure ----
    pu = jnp.dot(sh2_ref[pl.ds(0, R2), :], p1, preferred_element_type=f32)
    pd = jnp.dot(sh2_ref[pl.ds(R2, R2), :], p1, preferred_element_type=f32)
    kb = W2 * C1                                                            # 128
    acc2 = jnp.dot(pu, w2b_ref[pl.ds(0, kb), :], preferred_element_type=f32)
    acc2 = acc2 + jnp.dot(p1, w2b_ref[pl.ds(kb, kb), :], preferred_element_type=f32)
    acc2 = acc2 + jnp.dot(pd, w2b_ref[pl.ds(2 * kb, kb), :], preferred_element_type=f32)
    h2 = jnp.maximum(jnp.maximum(acc2[:, :HALF2], acc2[:, HALF2:]) + b2t_ref[...], 0.0)

    # ---- H-half of maxpool2 (output rows permuted to h-major for the fc1 slices) ----
    p2 = jnp.maximum(
        jnp.dot(pe2_ref[pl.ds(0, R3), :], h2, preferred_element_type=f32),
        jnp.dot(pe2_ref[pl.ds(R3, R3), :], h2, preferred_element_type=f32))   # (R3, 128)

    # ---- fc1: 4 accumulated dots over static, vreg-aligned 8-row groups ----
    z1 = jnp.zeros((BT, FCPAD), f32)
    for hp in range(H3):
        z1 = z1 + jnp.dot(p2[hp * BT:(hp + 1) * BT, :],
                          fw1_ref[pl.ds(hp * HALF2, HALF2), :],
                          preferred_element_type=f32)
    z1 = jnp.maximum(z1 + fb1_ref[...], 0.0)
    # TODO(synk): nn.Dropout(0.3) is identity in eval mode; train-mode RNG dropout not implemented.

    # ---- fc2 + lane-dense (BT, 128) store; real logits sliced out in glue ----
    out_ref[...] = jnp.dot(z1, fw2_ref[...], preferred_element_type=f32) + fb2_ref[...]


# --------------------- parameter setup (glue) ---------------------

def init_torch_params(key):
    """Deterministic parameters in the PyTorch layouts of CNNClassifier."""
    ks = jax.random.split(key, 16)
    p = {}
    p['conv1_w'] = 0.2 * jax.random.normal(ks[0], (C1, 1, 3, 3), jnp.float32)
    p['conv1_b'] = 0.1 * jax.random.normal(ks[1], (C1,), jnp.float32)
    p['bn1_g'] = 1.0 + 0.1 * jax.random.normal(ks[2], (C1,), jnp.float32)
    p['bn1_b'] = 0.1 * jax.random.normal(ks[3], (C1,), jnp.float32)
    p['bn1_m'] = 0.1 * jax.random.normal(ks[4], (C1,), jnp.float32)
    p['bn1_v'] = 0.5 + jax.random.uniform(ks[5], (C1,), jnp.float32)
    p['conv2_w'] = 0.1 * jax.random.normal(ks[6], (C2, C1, 3, 3), jnp.float32)
    p['conv2_b'] = 0.1 * jax.random.normal(ks[7], (C2,), jnp.float32)
    p['bn2_g'] = 1.0 + 0.1 * jax.random.normal(ks[8], (C2,), jnp.float32)
    p['bn2_b'] = 0.1 * jax.random.normal(ks[9], (C2,), jnp.float32)
    p['bn2_m'] = 0.1 * jax.random.normal(ks[10], (C2,), jnp.float32)
    p['bn2_v'] = 0.5 + jax.random.uniform(ks[11], (C2,), jnp.float32)
    p['fc1_w'] = 0.05 * jax.random.normal(ks[12], (FC1_OUT, FCIN), jnp.float32)
    p['fc1_b'] = 0.1 * jax.random.normal(ks[13], (FC1_OUT,), jnp.float32)
    p['fc2_w'] = 0.1 * jax.random.normal(ks[14], (NCLASS, FC1_OUT), jnp.float32)
    p['fc2_b'] = 0.1 * jax.random.normal(ks[15], (FC1_OUT,), jnp.float32)[:NCLASS]
    return p


def pack_params(tp):
    """Fold BN(+conv bias) and repack everything into the kernel's matmul operands."""
    t = {k: np.asarray(v, np.float32) for k, v in tp.items()}
    s1 = t['bn1_g'] / np.sqrt(t['bn1_v'] + BN_EPS)
    b1f = s1 * (t['conv1_b'] - t['bn1_m']) + t['bn1_b']
    s2 = t['bn2_g'] / np.sqrt(t['bn2_v'] + BN_EPS)
    b2f = s2 * (t['conv2_b'] - t['bn2_m']) + t['bn2_b']

    # conv1 banded weights: rows [ky*W1 + w_in], cols (w%2)*HALF1 + (w//2)*C1 + c
    m1 = np.zeros((3, W1, 2 * HALF1), np.float32)
    for ky in range(3):
        for w in range(W1):
            for kx in range(3):
                wi = w + kx - 1
                if 0 <= wi < W1:
                    c0 = (w % 2) * HALF1 + (w // 2) * C1
                    m1[ky, wi, c0:c0 + C1] += t['conv1_w'][:, 0, ky, kx] * s1
    w1b = m1.reshape(3 * W1, 2 * HALF1)                       # (48, 256)
    b1t = np.tile(b1f, W2)[None, :]                           # (1, 128), lane = w'*16+c

    # conv2 banded weights: rows [ky*(W2*C1) + w_in*C1 + c], cols (w%2)*HALF2 + (w//2)*C2 + o
    m2 = np.zeros((3, W2 * C1, 2 * HALF2), np.float32)
    for ky in range(3):
        for w in range(W2):
            for kx in range(3):
                wi = w + kx - 1
                if 0 <= wi < W2:
                    c0 = (w % 2) * HALF2 + (w // 2) * C2
                    m2[ky, wi * C1:(wi + 1) * C1, c0:c0 + C2] += (
                        t['conv2_w'][:, :, ky, kx] * s2[:, None]).T
    w2b = m2.reshape(3 * W2 * C1, 2 * HALF2)                  # (384, 256)
    b2t = np.tile(b2f, W3)[None, :]                           # (1, 128), lane = w''*32+o

    # vertical-shift matrices (rows flattened as n*H + h within one BT-sample tile)
    def shift_mats(h):
        r = BT * h
        sm = np.zeros((2, r, r), np.float32)
        for nn in range(BT):
            for hh in range(h):
                row = nn * h + hh
                if hh - 1 >= 0:
                    sm[0, row, row - 1] = 1.0     # tap ky=0 reads row h-1
                if hh + 1 < h:
                    sm[1, row, row + 1] = 1.0     # tap ky=2 reads row h+1
        return sm.reshape(2 * r, r)
    sh1 = shift_mats(H1)                                      # (256, 128)
    sh2 = shift_mats(H2)                                      # (128, 64)

    # maxpool H-half even/odd row-selection matrices
    pe1 = np.zeros((2, R2, R1), np.float32)
    for nn in range(BT):
        for hp in range(H2):
            pe1[0, nn * H2 + hp, nn * H1 + 2 * hp] = 1.0
            pe1[1, nn * H2 + hp, nn * H1 + 2 * hp + 1] = 1.0
    pe1 = pe1.reshape(2 * R2, R1)                             # (128, 128)
    pe2 = np.zeros((2, R3, R2), np.float32)
    for nn in range(BT):
        for hp in range(H3):
            pe2[0, hp * BT + nn, nn * H2 + 2 * hp] = 1.0      # h-major output rows
            pe2[1, hp * BT + nn, nn * H2 + 2 * hp + 1] = 1.0
    pe2 = pe2.reshape(2 * R3, R2)                             # (64, 64)

    # fc1: torch flat index o*(H3*W3) + h*W3 + w  ->  kernel row h*HALF2 + w*C2 + o
    fw1 = np.zeros((H3 * HALF2, FCPAD), np.float32)           # (512, 128)
    for hp in range(H3):
        for wp in range(W3):
            for o in range(C2):
                fw1[hp * HALF2 + wp * C2 + o, :FC1_OUT] = \
                    t['fc1_w'][:, o * (H3 * W3) + hp * W3 + wp]
    fb1 = np.zeros((1, FCPAD), np.float32)
    fb1[0, :FC1_OUT] = t['fc1_b']
    fw2 = np.zeros((FCPAD, FCPAD), np.float32)
    fw2[:FC1_OUT, :NCLASS] = t['fc2_w'].T
    fb2 = np.zeros((1, FCPAD), np.float32)
    fb2[0, :NCLASS] = t['fc2_b']

    return dict(sh1=sh1, w1b=w1b, b1t=b1t, sh2=sh2, w2b=w2b, b2t=b2t,
                pe1=pe1, pe2=pe2, fw1=fw1, fb1=fb1, fw2=fw2, fb2=fb2)


def cnn_forward(x_nchw, tp):
    """x_nchw: (n, 1, n_mels, time_frames) float32 -> logits (n, NCLASS)."""
    kp = pack_params(tp)
    n = x_nchw.shape[0]
    npad = ((n + BT - 1) // BT) * BT                 # batch padded to a BT multiple
    xpd = jnp.pad(x_nchw.astype(jnp.float32),
                  ((0, npad - n), (0, 0), (0, 0), (0, 0)))
    xk = xpd[:, 0].reshape(npad * H1, W1)            # raw input, rows = n*H1 + h

    full = lambda b: (0, 0)
    grid_spec = pltpu.PrefetchScalarGridSpec(
        num_scalar_prefetch=0,
        grid=(npad // BT,),
        in_specs=[
            pl.BlockSpec((BT * H1, W1), lambda b: (b, 0)),     # x
            pl.BlockSpec(kp['sh1'].shape, full),
            pl.BlockSpec(kp['w1b'].shape, full),
            pl.BlockSpec(kp['b1t'].shape, full),
            pl.BlockSpec(kp['sh2'].shape, full),
            pl.BlockSpec(kp['w2b'].shape, full),
            pl.BlockSpec(kp['b2t'].shape, full),
            pl.BlockSpec(kp['pe1'].shape, full),
            pl.BlockSpec(kp['pe2'].shape, full),
            pl.BlockSpec(kp['fw1'].shape, full),
            pl.BlockSpec(kp['fb1'].shape, full),
            pl.BlockSpec(kp['fw2'].shape, full),
            pl.BlockSpec(kp['fb2'].shape, full),
        ],
        out_specs=pl.BlockSpec((BT, FCPAD), lambda b: (b, 0)),
    )
    out = pl.pallas_call(
        cnn_kernel,
        out_shape=jax.ShapeDtypeStruct((npad, FCPAD), jnp.float32),
        grid_spec=grid_spec,
        compiler_params=pltpu.CompilerParams(
            dimension_semantics=("parallel",),       # shards batch tiles across v7x cores
            vmem_limit_bytes=32 * 1024 * 1024,       # safe on v7x's smaller VMEM
        ),
    )(xk, kp['sh1'], kp['w1b'], kp['b1t'], kp['sh2'], kp['w2b'], kp['b2t'],
      kp['pe1'], kp['pe2'], kp['fw1'], kp['fb1'], kp['fw2'], kp['fb2'])
    return out[:n, :NCLASS]


# --------------------- pure-JAX reference (PyTorch semantics) ---------------------

def reference_forward(x, tp):
    def bn(y, g, b, m, v):
        return (g[None, :, None, None] * (y - m[None, :, None, None])
                / jnp.sqrt(v[None, :, None, None] + BN_EPS) + b[None, :, None, None])

    y = lax.conv_general_dilated(x, tp['conv1_w'], (1, 1), ((1, 1), (1, 1)),
                                 dimension_numbers=('NCHW', 'OIHW', 'NCHW'))
    y = y + tp['conv1_b'][None, :, None, None]
    y = jnp.maximum(bn(y, tp['bn1_g'], tp['bn1_b'], tp['bn1_m'], tp['bn1_v']), 0.0)
    y = lax.reduce_window(y, -jnp.inf, lax.max, (1, 1, 2, 2), (1, 1, 2, 2), 'VALID')
    y = lax.conv_general_dilated(y, tp['conv2_w'], (1, 1), ((1, 1), (1, 1)),
                                 dimension_numbers=('NCHW', 'OIHW', 'NCHW'))
    y = y + tp['conv2_b'][None, :, None, None]
    y = jnp.maximum(bn(y, tp['bn2_g'], tp['bn2_b'], tp['bn2_m'], tp['bn2_v']), 0.0)
    y = lax.reduce_window(y, -jnp.inf, lax.max, (1, 1, 2, 2), (1, 1, 2, 2), 'VALID')
    y = y.reshape(y.shape[0], -1)                 # NCHW flatten order
    y = jnp.maximum(y @ tp['fc1_w'].T + tp['fc1_b'], 0.0)
    y = y @ tp['fc2_w'].T + tp['fc2_b']
    return y


if __name__ == "__main__":
    key = jax.random.PRNGKey(0)
    kx, kp_ = jax.random.split(key)
    x = jax.random.normal(kx, (N, 1, NMELS, TFRAMES), jnp.float32)
    torch_params = init_torch_params(kp_)

    logits = cnn_forward(x, torch_params)
    logits = jax.block_until_ready(logits)
    assert logits.shape == (N, NCLASS)

    ref = reference_forward(x, torch_params)
    if not jnp.allclose(logits, ref, rtol=5e-2, atol=5e-2):
        raise AssertionError(
            f"mismatch: max|diff|={float(jnp.max(jnp.abs(logits - ref)))}\n"
            f"kernel={logits}\nref={ref}")
    print("KERNEL_OK")
</pallas_src>

<mosaic_0001>
module attributes {stable_mosaic.version = 11 : i64} {
  func.func @cnn_kernel(%arg0: i32, %arg1: memref<128x16xf32, #tpu.memory_space<vmem>>, %arg2: memref<256x128xf32, #tpu.memory_space<vmem>>, %arg3: memref<48x256xf32, #tpu.memory_space<vmem>>, %arg4: memref<1x128xf32, #tpu.memory_space<vmem>>, %arg5: memref<128x64xf32, #tpu.memory_space<vmem>>, %arg6: memref<384x256xf32, #tpu.memory_space<vmem>>, %arg7: memref<1x128xf32, #tpu.memory_space<vmem>>, %arg8: memref<128x128xf32, #tpu.memory_space<vmem>>, %arg9: memref<64x64xf32, #tpu.memory_space<vmem>>, %arg10: memref<512x128xf32, #tpu.memory_space<vmem>>, %arg11: memref<1x128xf32, #tpu.memory_space<vmem>>, %arg12: memref<128x128xf32, #tpu.memory_space<vmem>>, %arg13: memref<1x128xf32, #tpu.memory_space<vmem>>, %arg14: memref<8x128xf32, #tpu.memory_space<vmem>>) attributes {dimension_semantics = [#tpu.dimension_semantics<parallel>], iteration_bounds = array<i64: 1>, scalar_prefetch = 0 : i64, scratch_operands = 0 : i64, tpu.core_type = #tpu.core_type<tc>, window_params = [{transform_indices = @transform_0, window_bounds = array<i64: 128, 16>}, {pipeline_mode = #tpu.pipeline_mode<synchronous>, transform_indices = @transform_1, window_bounds = array<i64: 256, 128>}, {pipeline_mode = #tpu.pipeline_mode<synchronous>, transform_indices = @transform_2, window_bounds = array<i64: 48, 256>}, {pipeline_mode = #tpu.pipeline_mode<synchronous>, transform_indices = @transform_3, window_bounds = array<i64: 1, 128>}, {pipeline_mode = #tpu.pipeline_mode<synchronous>, transform_indices = @transform_4, window_bounds = array<i64: 128, 64>}, {pipeline_mode = #tpu.pipeline_mode<synchronous>, transform_indices = @transform_5, window_bounds = array<i64: 384, 256>}, {pipeline_mode = #tpu.pipeline_mode<synchronous>, transform_indices = @transform_6, window_bounds = array<i64: 1, 128>}, {pipeline_mode = #tpu.pipeline_mode<synchronous>, transform_indices = @transform_7, window_bounds = array<i64: 128, 128>}, {pipeline_mode = #tpu.pipeline_mode<synchronous>, transform_indices = @transform_8, window_bounds = array<i64: 64, 64>}, {pipeline_mode = #tpu.pipeline_mode<synchronous>, transform_indices = @transform_9, window_bounds = array<i64: 512, 128>}, {pipeline_mode = #tpu.pipeline_mode<synchronous>, transform_indices = @transform_10, window_bounds = array<i64: 1, 128>}, {pipeline_mode = #tpu.pipeline_mode<synchronous>, transform_indices = @transform_11, window_bounds = array<i64: 128, 128>}, {pipeline_mode = #tpu.pipeline_mode<synchronous>, transform_indices = @transform_12, window_bounds = array<i64: 1, 128>}, {transform_indices = @transform_13, window_bounds = array<i64: 8, 128>}]} {
    %c0 = arith.constant 0 : index
    %c0_0 = arith.constant 0 : index
    %0 = vector.load %arg1[%c0, %c0_0] : memref<128x16xf32, #tpu.memory_space<vmem>>, vector<128x16xf32>
    %c0_1 = arith.constant 0 : index
    %c0_2 = arith.constant 0 : index
    %1 = vector.load %arg2[%c0_1, %c0_2] : memref<256x128xf32, #tpu.memory_space<vmem>>, vector<128x128xf32>
    %cst = arith.constant dense<0.000000e+00> : vector<128x16xf32>
    %2 = tpu.matmul %1, %0, %cst {dimension_numbers = #tpu.dot_dimension_numbers<[1], [0], [0], [1], [0, 0, 1, 1], [], []>} : vector<128x128xf32>, vector<128x16xf32>, vector<128x16xf32> -> vector<128x16xf32>
    %c128 = arith.constant 128 : index
    %c0_3 = arith.constant 0 : index
    %3 = vector.load %arg2[%c128, %c0_3] : memref<256x128xf32, #tpu.memory_space<vmem>>, vector<128x128xf32>
    %cst_4 = arith.constant dense<0.000000e+00> : vector<128x16xf32>
    %4 = tpu.matmul %3, %0, %cst_4 {dimension_numbers = #tpu.dot_dimension_numbers<[1], [0], [0], [1], [0, 0, 1, 1], [], []>} : vector<128x128xf32>, vector<128x16xf32>, vector<128x16xf32> -> vector<128x16xf32>
    %c0_5 = arith.constant 0 : index
    %c0_6 = arith.constant 0 : index
    %5 = vector.load %arg3[%c0_5, %c0_6] : memref<48x256xf32, #tpu.memory_space<vmem>>, vector<16x256xf32>
    %cst_7 = arith.constant dense<0.000000e+00> : vector<128x256xf32>
    %6 = tpu.matmul %2, %5, %cst_7 {dimension_numbers = #tpu.dot_dimension_numbers<[1], [0], [0], [1], [0, 0, 1, 1], [], []>} : vector<128x16xf32>, vector<16x256xf32>, vector<128x256xf32> -> vector<128x256xf32>
    %c16 = arith.constant 16 : index
    %c0_8 = arith.constant 0 : index
    %7 = vector.load %arg3[%c16, %c0_8] : memref<48x256xf32, #tpu.memory_space<vmem>>, vector<16x256xf32>
    %cst_9 = arith.constant dense<0.000000e+00> : vector<128x256xf32>
    %8 = tpu.matmul %0, %7, %cst_9 {dimension_numbers = #tpu.dot_dimension_numbers<[1], [0], [0], [1], [0, 0, 1, 1], [], []>} : vector<128x16xf32>, vector<16x256xf32>, vector<128x256xf32> -> vector<128x256xf32>
    %9 = arith.addf %6, %8 : vector<128x256xf32>
    %c32 = arith.constant 32 : index
    %c0_10 = arith.constant 0 : index
    %10 = vector.load %arg3[%c32, %c0_10] : memref<48x256xf32, #tpu.memory_space<vmem>>, vector<16x256xf32>
    %cst_11 = arith.constant dense<0.000000e+00> : vector<128x256xf32>
    %11 = tpu.matmul %4, %10, %cst_11 {dimension_numbers = #tpu.dot_dimension_numbers<[1], [0], [0], [1], [0, 0, 1, 1], [], []>} : vector<128x16xf32>, vector<16x256xf32>, vector<128x256xf32> -> vector<128x256xf32>
    %12 = arith.addf %9, %11 : vector<128x256xf32>
    %13 = vector.extract_strided_slice %12 {offsets = [0, 0], sizes = [128, 128], strides = [1, 1]} : vector<128x256xf32> to vector<128x128xf32>
    %14 = vector.extract_strided_slice %12 {offsets = [0, 128], sizes = [128, 128], strides = [1, 1]} : vector<128x256xf32> to vector<128x128xf32>
    %15 = arith.maximumf %13, %14 : vector<128x128xf32>
    %c0_12 = arith.constant 0 : index
    %c0_13 = arith.constant 0 : index
    %16 = vector.load %arg4[%c0_12, %c0_13] : memref<1x128xf32, #tpu.memory_space<vmem>>, vector<1x128xf32>
    %17 = vector.broadcast %16 : vector<1x128xf32> to vector<128x128xf32>
    %18 = arith.addf %15, %17 : vector<128x128xf32>
    %cst_14 = arith.constant 0.000000e+00 : f32
    %19 = vector.broadcast %cst_14 : f32 to vector<128x128xf32>
    %20 = arith.maximumf %18, %19 : vector<128x128xf32>
    %c0_15 = arith.constant 0 : index
    %c0_16 = arith.constant 0 : index
    %21 = vector.load %arg8[%c0_15, %c0_16] : memref<128x128xf32, #tpu.memory_space<vmem>>, vector<64x128xf32>
    %cst_17 = arith.constant dense<0.000000e+00> : vector<64x128xf32>
    %22 = tpu.matmul %21, %20, %cst_17 {dimension_numbers = #tpu.dot_dimension_numbers<[1], [0], [0], [1], [0, 0, 1, 1], [], []>} : vector<64x128xf32>, vector<128x128xf32>, vector<64x128xf32> -> vector<64x128xf32>
    %c64 = arith.constant 64 : index
    %c0_18 = arith.constant 0 : index
    %23 = vector.load %arg8[%c64, %c0_18] : memref<128x128xf32, #tpu.memory_space<vmem>>, vector<64x128xf32>
    %cst_19 = arith.constant dense<0.000000e+00> : vector<64x128xf32>
    %24 = tpu.matmul %23, %20, %cst_19 {dimension_numbers = #tpu.dot_dimension_numbers<[1], [0], [0], [1], [0, 0, 1, 1], [], []>} : vector<64x128xf32>, vector<128x128xf32>, vector<64x128xf32> -> vector<64x128xf32>
    %25 = arith.maximumf %22, %24 : vector<64x128xf32>
    %c0_20 = arith.constant 0 : index
    %c0_21 = arith.constant 0 : index
    %26 = vector.load %arg5[%c0_20, %c0_21] : memref<128x64xf32, #tpu.memory_space<vmem>>, vector<64x64xf32>
    %cst_22 = arith.constant dense<0.000000e+00> : vector<64x128xf32>
    %27 = tpu.matmul %26, %25, %cst_22 {dimension_numbers = #tpu.dot_dimension_numbers<[1], [0], [0], [1], [0, 0, 1, 1], [], []>} : vector<64x64xf32>, vector<64x128xf32>, vector<64x128xf32> -> vector<64x128xf32>
    %c64_23 = arith.constant 64 : index
    %c0_24 = arith.constant 0 : index
    %28 = vector.load %arg5[%c64_23, %c0_24] : memref<128x64xf32, #tpu.memory_space<vmem>>, vector<64x64xf32>
    %cst_25 = arith.constant dense<0.000000e+00> : vector<64x128xf32>
    %29 = tpu.matmul %28, %25, %cst_25 {dimension_numbers = #tpu.dot_dimension_numbers<[1], [0], [0], [1], [0, 0, 1, 1], [], []>} : vector<64x64xf32>, vector<64x128xf32>, vector<64x128xf32> -> vector<64x128xf32>
    %c0_26 = arith.constant 0 : index
    %c0_27 = arith.constant 0 : index
    %30 = vector.load %arg6[%c0_26, %c0_27] : memref<384x256xf32, #tpu.memory_space<vmem>>, vector<128x256xf32>
    %cst_28 = arith.constant dense<0.000000e+00> : vector<64x256xf32>
    %31 = tpu.matmul %27, %30, %cst_28 {dimension_numbers = #tpu.dot_dimension_numbers<[1], [0], [0], [1], [0, 0, 1, 1], [], []>} : vector<64x128xf32>, vector<128x256xf32>, vector<64x256xf32> -> vector<64x256xf32>
    %c128_29 = arith.constant 128 : index
    %c0_30 = arith.constant 0 : index
    %32 = vector.load %arg6[%c128_29, %c0_30] : memref<384x256xf32, #tpu.memory_space<vmem>>, vector<128x256xf32>
    %cst_31 = arith.constant dense<0.000000e+00> : vector<64x256xf32>
    %33 = tpu.matmul %25, %32, %cst_31 {dimension_numbers = #tpu.dot_dimension_numbers<[1], [0], [0], [1], [0, 0, 1, 1], [], []>} : vector<64x128xf32>, vector<128x256xf32>, vector<64x256xf32> -> vector<64x256xf32>
    %34 = arith.addf %31, %33 : vector<64x256xf32>
    %c256 = arith.constant 256 : index
    %c0_32 = arith.constant 0 : index
    %35 = vector.load %arg6[%c256, %c0_32] : memref<384x256xf32, #tpu.memory_space<vmem>>, vector<128x256xf32>
    %cst_33 = arith.constant dense<0.000000e+00> : vector<64x256xf32>
    %36 = tpu.matmul %29, %35, %cst_33 {dimension_numbers = #tpu.dot_dimension_numbers<[1], [0], [0], [1], [0, 0, 1, 1], [], []>} : vector<64x128xf32>, vector<128x256xf32>, vector<64x256xf32> -> vector<64x256xf32>
    %37 = arith.addf %34, %36 : vector<64x256xf32>
    %38 = vector.extract_strided_slice %37 {offsets = [0, 0], sizes = [64, 128], strides = [1, 1]} : vector<64x256xf32> to vector<64x128xf32>
    %39 = vector.extract_strided_slice %37 {offsets = [0, 128], sizes = [64, 128], strides = [1, 1]} : vector<64x256xf32> to vector<64x128xf32>
    %40 = arith.maximumf %38, %39 : vector<64x128xf32>
    %c0_34 = arith.constant 0 : index
    %c0_35 = arith.constant 0 : index
    %41 = vector.load %arg7[%c0_34, %c0_35] : memref<1x128xf32, #tpu.memory_space<vmem>>, vector<1x128xf32>
    %42 = vector.broadcast %41 : vector<1x128xf32> to vector<64x128xf32>
    %43 = arith.addf %40, %42 : vector<64x128xf32>
    %cst_36 = arith.constant 0.000000e+00 : f32
    %44 = vector.broadcast %cst_36 : f32 to vector<64x128xf32>
    %45 = arith.maximumf %43, %44 : vector<64x128xf32>
    %c0_37 = arith.constant 0 : index
    %c0_38 = arith.constant 0 : index
    %46 = vector.load %arg9[%c0_37, %c0_38] : memref<64x64xf32, #tpu.memory_space<vmem>>, vector<32x64xf32>
    %cst_39 = arith.constant dense<0.000000e+00> : vector<32x128xf32>
    %47 = tpu.matmul %46, %45, %cst_39 {dimension_numbers = #tpu.dot_dimension_numbers<[1], [0], [0], [1], [0, 0, 1, 1], [], []>} : vector<32x64xf32>, vector<64x128xf32>, vector<32x128xf32> -> vector<32x128xf32>
    %c32_40 = arith.constant 32 : index
    %c0_41 = arith.constant 0 : index
    %48 = vector.load %arg9[%c32_40, %c0_41] : memref<64x64xf32, #tpu.memory_space<vmem>>, vector<32x64xf32>
    %cst_42 = arith.constant dense<0.000000e+00> : vector<32x128xf32>
    %49 = tpu.matmul %48, %45, %cst_42 {dimension_numbers = #tpu.dot_dimension_numbers<[1], [0], [0], [1], [0, 0, 1, 1], [], []>} : vector<32x64xf32>, vector<64x128xf32>, vector<32x128xf32> -> vector<32x128xf32>
    %50 = arith.maximumf %47, %49 : vector<32x128xf32>
    %cst_43 = arith.constant 0.000000e+00 : f32
    %51 = vector.broadcast %cst_43 : f32 to vector<8x128xf32>
    %52 = vector.extract_strided_slice %50 {offsets = [0, 0], sizes = [8, 128], strides = [1, 1]} : vector<32x128xf32> to vector<8x128xf32>
    %c0_44 = arith.constant 0 : index
    %c0_45 = arith.constant 0 : index
    %53 = vector.load %arg10[%c0_44, %c0_45] : memref<512x128xf32, #tpu.memory_space<vmem>>, vector<128x128xf32>
    %cst_46 = arith.constant dense<0.000000e+00> : vector<8x128xf32>
    %54 = tpu.matmul %52, %53, %cst_46 {dimension_numbers = #tpu.dot_dimension_numbers<[1], [0], [0], [1], [0, 0, 1, 1], [], []>} : vector<8x128xf32>, vector<128x128xf32>, vector<8x128xf32> -> vector<8x128xf32>
    %55 = arith.addf %51, %54 : vector<8x128xf32>
    %56 = vector.extract_strided_slice %50 {offsets = [8, 0], sizes = [8, 128], strides = [1, 1]} : vector<32x128xf32> to vector<8x128xf32>
    %c128_47 = arith.constant 128 : index
    %c0_48 = arith.constant 0 : index
    %57 = vector.load %arg10[%c128_47, %c0_48] : memref<512x128xf32, #tpu.memory_space<vmem>>, vector<128x128xf32>
    %cst_49 = arith.constant dense<0.000000e+00> : vector<8x128xf32>
    %58 = tpu.matmul %56, %57, %cst_49 {dimension_numbers = #tpu.dot_dimension_numbers<[1], [0], [0], [1], [0, 0, 1, 1], [], []>} : vector<8x128xf32>, vector<128x128xf32>, vector<8x128xf32> -> vector<8x128xf32>
    %59 = arith.addf %55, %58 : vector<8x128xf32>
    %60 = vector.extract_strided_slice %50 {offsets = [16, 0], sizes = [8, 128], strides = [1, 1]} : vector<32x128xf32> to vector<8x128xf32>
    %c256_50 = arith.constant 256 : index
    %c0_51 = arith.constant 0 : index
    %61 = vector.load %arg10[%c256_50, %c0_51] : memref<512x128xf32, #tpu.memory_space<vmem>>, vector<128x128xf32>
    %cst_52 = arith.constant dense<0.000000e+00> : vector<8x128xf32>
    %62 = tpu.matmul %60, %61, %cst_52 {dimension_numbers = #tpu.dot_dimension_numbers<[1], [0], [0], [1], [0, 0, 1, 1], [], []>} : vector<8x128xf32>, vector<128x128xf32>, vector<8x128xf32> -> vector<8x128xf32>
    %63 = arith.addf %59, %62 : vector<8x128xf32>
    %64 = vector.extract_strided_slice %50 {offsets = [24, 0], sizes = [8, 128], strides = [1, 1]} : vector<32x128xf32> to vector<8x128xf32>
    %c384 = arith.constant 384 : index
    %c0_53 = arith.constant 0 : index
    %65 = vector.load %arg10[%c384, %c0_53] : memref<512x128xf32, #tpu.memory_space<vmem>>, vector<128x128xf32>
    %cst_54 = arith.constant dense<0.000000e+00> : vector<8x128xf32>
    %66 = tpu.matmul %64, %65, %cst_54 {dimension_numbers = #tpu.dot_dimension_numbers<[1], [0], [0], [1], [0, 0, 1, 1], [], []>} : vector<8x128xf32>, vector<128x128xf32>, vector<8x128xf32> -> vector<8x128xf32>
    %67 = arith.addf %63, %66 : vector<8x128xf32>
    %c0_55 = arith.constant 0 : index
    %c0_56 = arith.constant 0 : index
    %68 = vector.load %arg11[%c0_55, %c0_56] : memref<1x128xf32, #tpu.memory_space<vmem>>, vector<1x128xf32>
    %69 = vector.broadcast %68 : vector<1x128xf32> to vector<8x128xf32>
    %70 = arith.addf %67, %69 : vector<8x128xf32>
    %cst_57 = arith.constant 0.000000e+00 : f32
    %71 = vector.broadcast %cst_57 : f32 to vector<8x128xf32>
    %72 = arith.maximumf %70, %71 : vector<8x128xf32>
    %c0_58 = arith.constant 0 : index
    %c0_59 = arith.constant 0 : index
    %73 = vector.load %arg12[%c0_58, %c0_59] : memref<128x128xf32, #tpu.memory_space<vmem>>, vector<128x128xf32>
    %cst_60 = arith.constant dense<0.000000e+00> : vector<8x128xf32>
    %74 = tpu.matmul %72, %73, %cst_60 {dimension_numbers = #tpu.dot_dimension_numbers<[1], [0], [0], [1], [0, 0, 1, 1], [], []>} : vector<8x128xf32>, vector<128x128xf32>, vector<8x128xf32> -> vector<8x128xf32>
    %c0_61 = arith.constant 0 : index
    %c0_62 = arith.constant 0 : index
    %75 = vector.load %arg13[%c0_61, %c0_62] : memref<1x128xf32, #tpu.memory_space<vmem>>, vector<1x128xf32>
    %76 = vector.broadcast %75 : vector<1x128xf32> to vector<8x128xf32>
    %77 = arith.addf %74, %76 : vector<8x128xf32>
    %c0_63 = arith.constant 0 : index
    %c0_64 = arith.constant 0 : index
    %78 = vector.load %arg14[%c0_63, %c0_64] : memref<8x128xf32, #tpu.memory_space<vmem>>, vector<8x128xf32>
    tpu.vector_store %arg14[%c0_63, %c0_64], %77 {strides = array<i32>} : memref<8x128xf32, #tpu.memory_space<vmem>>, vector<8x128xf32>,
    return
  }
  func.func @transform_0(%arg0: i32) -> (i32, i32) {
    %c0_i32 = arith.constant 0 : i32
    %c0_i32_0 = arith.constant 0 : i32
    return %arg0, %c0_i32 : i32, i32
  }
  func.func @transform_1(%arg0: i32) -> (i32, i32) {
    %c0_i32 = arith.constant 0 : i32
    %c0_i32_0 = arith.constant 0 : i32
    %c0_i32_1 = arith.constant 0 : i32
    return %c0_i32, %c0_i32_0 : i32, i32
  }
  func.func @transform_2(%arg0: i32) -> (i32, i32) {
    %c0_i32 = arith.constant 0 : i32
    %c0_i32_0 = arith.constant 0 : i32
    %c0_i32_1 = arith.constant 0 : i32
    return %c0_i32, %c0_i32_0 : i32, i32
  }
  func.func @transform_3(%arg0: i32) -> (i32, i32) {
    %c0_i32 = arith.constant 0 : i32
    %c0_i32_0 = arith.constant 0 : i32
    %c0_i32_1 = arith.constant 0 : i32
    return %c0_i32, %c0_i32_0 : i32, i32
  }
  func.func @transform_4(%arg0: i32) -> (i32, i32) {
    %c0_i32 = arith.constant 0 : i32
    %c0_i32_0 = arith.constant 0 : i32
    %c0_i32_1 = arith.constant 0 : i32
    return %c0_i32, %c0_i32_0 : i32, i32
  }
  func.func @transform_5(%arg0: i32) -> (i32, i32) {
    %c0_i32 = arith.constant 0 : i32
    %c0_i32_0 = arith.constant 0 : i32
    %c0_i32_1 = arith.constant 0 : i32
    return %c0_i32, %c0_i32_0 : i32, i32
  }
  func.func @transform_6(%arg0: i32) -> (i32, i32) {
    %c0_i32 = arith.constant 0 : i32
    %c0_i32_0 = arith.constant 0 : i32
    %c0_i32_1 = arith.constant 0 : i32
    return %c0_i32, %c0_i32_0 : i32, i32
  }
  func.func @transform_7(%arg0: i32) -> (i32, i32) {
    %c0_i32 = arith.constant 0 : i32
    %c0_i32_0 = arith.constant 0 : i32
    %c0_i32_1 = arith.constant 0 : i32
    return %c0_i32, %c0_i32_0 : i32, i32
  }
  func.func @transform_8(%arg0: i32) -> (i32, i32) {
    %c0_i32 = arith.constant 0 : i32
    %c0_i32_0 = arith.constant 0 : i32
    %c0_i32_1 = arith.constant 0 : i32
    return %c0_i32, %c0_i32_0 : i32, i32
  }
  func.func @transform_9(%arg0: i32) -> (i32, i32) {
    %c0_i32 = arith.constant 0 : i32
    %c0_i32_0 = arith.constant 0 : i32
    %c0_i32_1 = arith.constant 0 : i32
    return %c0_i32, %c0_i32_0 : i32, i32
  }
  func.func @transform_10(%arg0: i32) -> (i32, i32) {
    %c0_i32 = arith.constant 0 : i32
    %c0_i32_0 = arith.constant 0 : i32
    %c0_i32_1 = arith.constant 0 : i32
    return %c0_i32, %c0_i32_0 : i32, i32
  }
  func.func @transform_11(%arg0: i32) -> (i32, i32) {
    %c0_i32 = arith.constant 0 : i32
    %c0_i32_0 = arith.constant 0 : i32
    %c0_i32_1 = arith.constant 0 : i32
    return %c0_i32, %c0_i32_0 : i32, i32
  }
  func.func @transform_12(%arg0: i32) -> (i32, i32) {
    %c0_i32 = arith.constant 0 : i32
    %c0_i32_0 = arith.constant 0 : i32
    %c0_i32_1 = arith.constant 0 : i32
    return %c0_i32, %c0_i32_0 : i32, i32
  }
  func.func @transform_13(%arg0: i32) -> (i32, i32) {
    %c0_i32 = arith.constant 0 : i32
    %c0_i32_0 = arith.constant 0 : i32
    return %arg0, %c0_i32 : i32, i32
  }
}

</mosaic_0001>

<llo_original>
// kernel: tpu_custom_call.1
$region0: #{tpu_custom_call.1}
  #allocation0 [shape = 'u32[]', space=smem, size = 0x4, offset = 0x4, fixed_abs, tag = 'smem constant byte address 0x4 - core index']
  #allocation1 [shape = 'u32[72,128]{1,0:T(1,128)}', space=vmem, size = 0x9000, scoped, tag = 'internal scratch']
  %s0 = inlined_call_operand.vmem [shape: f32[128,16], index: 0, kind: input, shape index: {}]
  %s1 = inlined_call_operand.vmem [shape: f32[256,128], index: 1, kind: input, shape index: {}]
  %s2 = inlined_call_operand.hbm [shape: f32[48,256], index: 2, kind: input, shape index: {}]
  %s3 = inlined_call_operand.vmem [shape: f32[1,128], index: 3, kind: input, shape index: {}]
  %s4 = inlined_call_operand.vmem [shape: f32[128,64], index: 4, kind: input, shape index: {}]
  %s5 = inlined_call_operand.hbm [shape: f32[384,256], index: 5, kind: input, shape index: {}]
  %s6 = inlined_call_operand.vmem [shape: f32[1,128], index: 6, kind: input, shape index: {}]
  %s7 = inlined_call_operand.hbm [shape: f32[128,128], index: 7, kind: input, shape index: {}]
  %s8 = inlined_call_operand.hbm [shape: f32[64,64], index: 8, kind: input, shape index: {}]
  %s9 = inlined_call_operand.hbm [shape: f32[512,128], index: 9, kind: input, shape index: {}]
  %s10 = inlined_call_operand.vmem [shape: f32[1,128], index: 10, kind: input, shape index: {}]
  %s11 = inlined_call_operand.hbm [shape: f32[128,128], index: 11, kind: input, shape index: {}]
  %s12 = inlined_call_operand.vmem [shape: f32[1,128], index: 12, kind: input, shape index: {}]
  %s13 = inlined_call_operand.hbm [shape: f32[8,128], index: 13, kind: output, shape index: {}]
  %s14 = sld [smem:[#allocation0]]
  $region86: #{tpu_custom_call.1} parent=0
    _
  %s16 = ssub.s32 1, %s14
  %s17 = scalar_select 0, %s16, %s14
  $region1: #{tpu_custom_call.1} parent=0
    #allocation2 [shape = 'u8[49152]{0}', space=vmem, size = 0xc000, scoped, tag = 'input window, operand 2, single buffered']
    #allocation3 [shape = 's32[1]{0}', space=sflag, size = 0x4, scoped, tag = 'scoped memory for tpu_custom_call.1']
    #allocation4 [shape = 's32[1]{0}', space=sflag, size = 0x4, scoped, tag = 'scoped memory for tpu_custom_call.1']
    #allocation5 [shape = 'u8[393216]{0}', space=vmem, size = 0x60000, scoped, tag = 'input window, operand 5, single buffered']
    #allocation6 [shape = 's32[1]{0}', space=sflag, size = 0x4, scoped, tag = 'scoped memory for tpu_custom_call.1']
    #allocation7 [shape = 'u8[65536]{0}', space=vmem, size = 0x10000, scoped, tag = 'input window, operand 7, single buffered']
    #allocation8 [shape = 'u8[32768]{0}', space=vmem, size = 0x8000, scoped, tag = 'input window, operand 8, single buffered']
    #allocation9 [shape = 's32[1]{0}', space=sflag, size = 0x4, scoped, tag = 'scoped memory for tpu_custom_call.1']
    #allocation10 [shape = 'u8[262144]{0}', space=vmem, size = 0x40000, scoped, tag = 'input window, operand 9, single buffered']
    #allocation11 [shape = 'u8[65536]{0}', space=vmem, size = 0x10000, scoped, tag = 'input window, operand 11, single buffered']
    #allocation12 [shape = 's32[1]{0}', space=sflag, size = 0x4, scoped, tag = 'scoped memory for tpu_custom_call.1']
    #allocation13 [shape = 'u8[4096]{0}', space=vmem, size = 0x1000, scoped, tag = 'output window, operand 0, single buffered']
    %18 = vsyncpa [#allocation3], 0
    %19 = vsyncpa [#allocation6], 0
    %20 = vsyncpa [#allocation9], 0
    %21 = vsyncpa [#allocation12], 0
    %22 = vsyncpa [#allocation4], 0
    // Predicated region
    $region2: #{tpu_custom_call.1} parent=1 // pred_check
      _
    $region3: #{tpu_custom_call.1} parent=1 // pred_check_branch
      %24 = sbr.rel (0) target = $region5
    $region4: #{tpu_custom_call.1} parent=1 // pred_region
      _
    $region5: #{tpu_custom_call.1} parent=1 // pred_fallthru
      _
    // Predicated region
    $region6: #{tpu_custom_call.1} parent=1 // pred_check
      _
    $region7: #{tpu_custom_call.1} parent=1 // pred_check_branch
      %26 = sbr.rel (0) target = $region9
    $region8: #{tpu_custom_call.1} parent=1 // pred_region
      _
    $region9: #{tpu_custom_call.1} parent=1 // pred_fallthru
      _
    // Predicated region
    $region10: #{tpu_custom_call.1} parent=1 // pred_check
      _
    $region11: #{tpu_custom_call.1} parent=1 // pred_check_branch
      %28 = sbr.rel (0) target = $region13
    $region12: #{tpu_custom_call.1} parent=1 // pred_region
      %30 = vsyncadd [#allocation3], 0
      %s31 = sshll.u32 %s2, 4
      %s32 = int_to_ptr.hbm [resolvable:$true] %s31
      %s33 = sshll.u32 [#allocation2], 4
      %s34 = int_to_ptr.vmem [resolvable:$true] %s33
      %39 = dma.hbm_to_vmem [thread:$0]  %s32, 1536, %s34, [#allocation3], 256, 256, 16
    $region13: #{tpu_custom_call.1} parent=1 // pred_fallthru
      _
    // Predicated region
    $region14: #{tpu_custom_call.1} parent=1 // pred_check
      _
    $region15: #{tpu_custom_call.1} parent=1 // pred_check_branch
      %41 = sbr.rel (0) target = $region17
    $region16: #{tpu_custom_call.1} parent=1 // pred_region
      _
    $region17: #{tpu_custom_call.1} parent=1 // pred_fallthru
      _
    // Predicated region
    $region18: #{tpu_custom_call.1} parent=1 // pred_check
      _
    $region19: #{tpu_custom_call.1} parent=1 // pred_check_branch
      %43 = sbr.rel (0) target = $region21
    $region20: #{tpu_custom_call.1} parent=1 // pred_region
      _
    $region21: #{tpu_custom_call.1} parent=1 // pred_fallthru
      _
    // Predicated region
    $region22: #{tpu_custom_call.1} parent=1 // pred_check
      _
    $region23: #{tpu_custom_call.1} parent=1 // pred_check_branch
      %45 = sbr.rel (0) target = $region25
    $region24: #{tpu_custom_call.1} parent=1 // pred_region
      %47 = vsyncadd [#allocation6], 0
      %s48 = sshll.u32 %s5, 4
      %s49 = int_to_ptr.hbm [resolvable:$true] %s48
      %s50 = sshll.u32 [#allocation5], 4
      %s51 = int_to_ptr.vmem [resolvable:$true] %s50
      %56 = dma.hbm_to_vmem [thread:$0]  %s49, 12288, %s51, [#allocation6], 256, 256, 16
    $region25: #{tpu_custom_call.1} parent=1 // pred_fallthru
      _
    // Predicated region
    $region26: #{tpu_custom_call.1} parent=1 // pred_check
      _
    $region27: #{tpu_custom_call.1} parent=1 // pred_check_branch
      %58 = sbr.rel (0) target = $region29
    $region28: #{tpu_custom_call.1} parent=1 // pred_region
      _
    $region29: #{tpu_custom_call.1} parent=1 // pred_fallthru
      _
    // Predicated region
    $region30: #{tpu_custom_call.1} parent=1 // pred_check
      _
    $region31: #{tpu_custom_call.1} parent=1 // pred_check_branch
      %60 = sbr.rel (0) target = $region33
    $region32: #{tpu_custom_call.1} parent=1 // pred_region
      %62 = vsyncadd [#allocation6], 0
      %s63 = sshll.u32 %s7, 4
      %s64 = int_to_ptr.hbm [resolvable:$true] %s63
      %s65 = sshll.u32 [#allocation7], 4
      %s66 = int_to_ptr.vmem [resolvable:$true] %s65
      %71 = dma.hbm_to_vmem [thread:$0]  %s64, 2048, %s66, [#allocation6], 128, 128, 8
    $region33: #{tpu_custom_call.1} parent=1 // pred_fallthru
      _
    // Predicated region
    $region34: #{tpu_custom_call.1} parent=1 // pred_check
      _
    $region35: #{tpu_custom_call.1} parent=1 // pred_check_branch
      %73 = sbr.rel (0) target = $region37
    $region36: #{tpu_custom_call.1} parent=1 // pred_region
      %75 = vsyncadd [#allocation9], 0
      %s76 = sshll.u32 %s8, 4
      %s77 = int_to_ptr.hbm [resolvable:$true] %s76
      %s78 = sshll.u32 [#allocation8], 4
      %s79 = int_to_ptr.vmem [resolvable:$true] %s78
      %84 = dma.hbm_to_vmem [thread:$0]  %s77, 1024, %s79, [#allocation9], 128, 128, 8
    $region37: #{tpu_custom_call.1} parent=1 // pred_fallthru
      _
    // Predicated region
    $region38: #{tpu_custom_call.1} parent=1 // pred_check
      _
    $region39: #{tpu_custom_call.1} parent=1 // pred_check_branch
      %86 = sbr.rel (0) target = $region41
    $region40: #{tpu_custom_call.1} parent=1 // pred_region
      %88 = vsyncadd [#allocation9], 0
      %s89 = sshll.u32 %s9, 4
      %s90 = int_to_ptr.hbm [resolvable:$true] %s89
      %s91 = sshll.u32 [#allocation10], 4
      %s92 = int_to_ptr.vmem [resolvable:$true] %s91
      %97 = dma.hbm_to_vmem [thread:$0]  %s90, 8192, %s92, [#allocation9], 128, 128, 8
    $region41: #{tpu_custom_call.1} parent=1 // pred_fallthru
      _
    // Predicated region
    $region42: #{tpu_custom_call.1} parent=1 // pred_check
      _
    $region43: #{tpu_custom_call.1} parent=1 // pred_check_branch
      %99 = sbr.rel (0) target = $region45
    $region44: #{tpu_custom_call.1} parent=1 // pred_region
      _
    $region45: #{tpu_custom_call.1} parent=1 // pred_fallthru
      _
    // Predicated region
    $region46: #{tpu_custom_call.1} parent=1 // pred_check
      _
    $region47: #{tpu_custom_call.1} parent=1 // pred_check_branch
      %101 = sbr.rel (0) target = $region49
    $region48: #{tpu_custom_call.1} parent=1 // pred_region
      %103 = vsyncadd [#allocation12], 0
      %s104 = sshll.u32 %s11, 4
      %s105 = int_to_ptr.hbm [resolvable:$true] %s104
      %s106 = sshll.u32 [#allocation11], 4
      %s107 = int_to_ptr.vmem [resolvable:$true] %s106
      %112 = dma.hbm_to_vmem [thread:$0]  %s105, 2048, %s107, [#allocation12], 128, 128, 8
    $region49: #{tpu_custom_call.1} parent=1 // pred_fallthru
      _
    // Predicated region
    $region50: #{tpu_custom_call.1} parent=1 // pred_check
      _
    $region51: #{tpu_custom_call.1} parent=1 // pred_check_branch
      %114 = sbr.rel (0) target = $region53
    $region52: #{tpu_custom_call.1} parent=1 // pred_region
      _
    $region53: #{tpu_custom_call.1} parent=1 // pred_fallthru
      _
    // Predicated region
    $region54: #{tpu_custom_call.1} parent=1 // pred_check
      _
    $region55: #{tpu_custom_call.1} parent=1 // pred_check_branch
      %116 = sbr.rel (0) target = $region57
    $region56: #{tpu_custom_call.1} parent=1 // pred_region
      %118 = dma.done [#allocation3], 1536
    $region57: #{tpu_custom_call.1} parent=1 // pred_fallthru
      _
    // Predicated region
    $region58: #{tpu_custom_call.1} parent=1 // pred_check
      _
    $region59: #{tpu_custom_call.1} parent=1 // pred_check_branch
      %120 = sbr.rel (0) target = $region61
    $region60: #{tpu_custom_call.1} parent=1 // pred_region
      %122 = dma.done [#allocation6], 12288
    $region61: #{tpu_custom_call.1} parent=1 // pred_fallthru
      _
    // Predicated region
    $region62: #{tpu_custom_call.1} parent=1 // pred_check
      _
    $region63: #{tpu_custom_call.1} parent=1 // pred_check_branch
      %124 = sbr.rel (0) target = $region65
    $region64: #{tpu_custom_call.1} parent=1 // pred_region
      %126 = dma.done [#allocation6], 2048
    $region65: #{tpu_custom_call.1} parent=1 // pred_fallthru
      _
    // Predicated region
    $region66: #{tpu_custom_call.1} parent=1 // pred_check
      _
    $region67: #{tpu_custom_call.1} parent=1 // pred_check_branch
      %128 = sbr.rel (0) target = $region69
    $region68: #{tpu_custom_call.1} parent=1 // pred_region
      %130 = dma.done [#allocation9], 1024
    $region69: #{tpu_custom_call.1} parent=1 // pred_fallthru
      _
    // Predicated region
    $region70: #{tpu_custom_call.1} parent=1 // pred_check
      _
    $region71: #{tpu_custom_call.1} parent=1 // pred_check_branch
      %132 = sbr.rel (0) target = $region73
    $region72: #{tpu_custom_call.1} parent=1 // pred_region
      %134 = dma.done [#allocation9], 8192
    $region73: #{tpu_custom_call.1} parent=1 // pred_fallthru
      _
    // Predicated region
    $region74: #{tpu_custom_call.1} parent=1 // pred_check
      _
    $region75: #{tpu_custom_call.1} parent=1 // pred_check_branch
      %136 = sbr.rel (0) target = $region77
    $region76: #{tpu_custom_call.1} parent=1 // pred_region
      %138 = dma.done [#allocation12], 2048
    $region77: #{tpu_custom_call.1} parent=1 // pred_fallthru
      _
    %v139 = vld [vmem:[%s0] sm:$0xff]
    %v140 = vld [vmem:[%s0 + $0x8] sm:$0xff]
    %v141 = vld [vmem:[%s0 + $0x10] sm:$0xff]
    %v142 = vld [vmem:[%s0 + $0x18] sm:$0xff]
    %v143 = vld [vmem:[%s0 + $0x20] sm:$0xff]
    %v144 = vld [vmem:[%s0 + $0x28] sm:$0xff]
    %v145 = vld [vmem:[%s0 + $0x30] sm:$0xff]
    %v146 = vld [vmem:[%s0 + $0x38] sm:$0xff]
    %v147 = vld [vmem:[%s0 + $0x40] sm:$0xff]
    %v148 = vld [vmem:[%s0 + $0x48] sm:$0xff]
    %v149 = vld [vmem:[%s0 + $0x50] sm:$0xff]
    %v150 = vld [vmem:[%s0 + $0x58] sm:$0xff]
    %v151 = vld [vmem:[%s0 + $0x60] sm:$0xff]
    %v152 = vld [vmem:[%s0 + $0x68] sm:$0xff]
    %v153 = vld [vmem:[%s0 + $0x70] sm:$0xff]
    %v154 = vld [vmem:[%s0 + $0x78] sm:$0xff]
    %v155 = vld [vmem:[%s1] sm:$0xff]
    %v156 = vld [vmem:[%s1 + $0x8] sm:$0xff]
    %v157 = vld [vmem:[%s1 + $0x10] sm:$0xff]
    %v158 = vld [vmem:[%s1 + $0x18] sm:$0xff]
    %v159 = vld [vmem:[%s1 + $0x20] sm:$0xff]
    %v160 = vld [vmem:[%s1 + $0x28] sm:$0xff]
    %v161 = vld [vmem:[%s1 + $0x30] sm:$0xff]
    %v162 = vld [vmem:[%s1 + $0x38] sm:$0xff]
    %v163 = vld [vmem:[%s1 + $0x40] sm:$0xff]
    %v164 = vld [vmem:[%s1 + $0x48] sm:$0xff]
    %v165 = vld [vmem:[%s1 + $0x50] sm:$0xff]
    %v166 = vld [vmem:[%s1 + $0x58] sm:$0xff]
    %v167 = vld [vmem:[%s1 + $0x60] sm:$0xff]
    %v168 = vld [vmem:[%s1 + $0x68] sm:$0xff]
    %v169 = vld [vmem:[%s1 + $0x70] sm:$0xff]
    %v170 = vld [vmem:[%s1 + $0x78] sm:$0xff]
    %171 = vmatpush.msra.mxu0 %v154
    %172 = vmatpush.msra.mxu0 %v153
    %173 = vmatpush.msra.mxu0 %v152
    %174 = vmatpush.msra.mxu0 %v151
    %175 = vmatpush.msra.mxu0 %v150
    %176 = vmatpush.msra.mxu0 %v149
    %177 = vmatpush.msra.mxu0 %v148
    %178 = vmatpush.msra.mxu0 %v147
    %179 = vmatpush.msra.mxu0 %v146
    %180 = vmatpush.msra.mxu0 %v145
    %181 = vmatpush.msra.mxu0 %v144
    %182 = vmatpush.msra.mxu0 %v143
    %183 = vmatpush.msra.mxu0 %v142
    %184 = vmatpush.msra.mxu0 %v141
    %185 = vmatpush.msra.mxu0 %v140
    %186 = vmatpush.msra.mxu0 %v139
    %187 = vmatmul.f32.gmra.mxu0 %v155
    %v188 = vpop.f32.mrf.mxu0
    %v189 = vadd.f32 0.0, %v188
    %190 = vmatmul.f32.gmra.mxu0 %v156
    %v191 = vpop.f32.mrf.mxu0
    %v192 = vadd.f32 0.0, %v191
    %193 = vmatmul.f32.gmra.mxu0 %v157
    %v194 = vpop.f32.mrf.mxu0
    %v195 = vadd.f32 0.0, %v194
    %196 = vmatmul.f32.gmra.mxu0 %v158
    %v197 = vpop.f32.mrf.mxu0
    %v198 = vadd.f32 0.0, %v197
    %199 = vmatmul.f32.gmra.mxu0 %v159
    %v200 = vpop.f32.mrf.mxu0
    %v201 = vadd.f32 0.0, %v200
    %202 = vmatmul.f32.gmra.mxu0 %v160
    %v203 = vpop.f32.mrf.mxu0
    %v204 = vadd.f32 0.0, %v203
    %205 = vmatmul.f32.gmra.mxu0 %v161
    %v206 = vpop.f32.mrf.mxu0
    %v207 = vadd.f32 0.0, %v206
    %208 = vmatmul.f32.gmra.mxu0 %v162
    %v209 = vpop.f32.mrf.mxu0
    %v210 = vadd.f32 0.0, %v209
    %211 = vmatmul.f32.gmra.mxu0 %v163
    %v212 = vpop.f32.mrf.mxu0
    %v213 = vadd.f32 0.0, %v212
    %214 = vmatmul.f32.gmra.mxu0 %v164
    %v215 = vpop.f32.mrf.mxu0
    %v216 = vadd.f32 0.0, %v215
    %217 = vmatmul.f32.gmra.mxu0 %v165
    %v218 = vpop.f32.mrf.mxu0
    %v219 = vadd.f32 0.0, %v218
    %220 = vmatmul.f32.gmra.mxu0 %v166
    %v221 = vpop.f32.mrf.mxu0
    %v222 = vadd.f32 0.0, %v221
    %223 = vmatmul.f32.gmra.mxu0 %v167
    %v224 = vpop.f32.mrf.mxu0
    %v225 = vadd.f32 0.0, %v224
    %226 = vmatmul.f32.gmra.mxu0 %v168
    %v227 = vpop.f32.mrf.mxu0
    %v228 = vadd.f32 0.0, %v227
    %229 = vmatmul.f32.gmra.mxu0 %v169
    %v230 = vpop.f32.mrf.mxu0
    %v231 = vadd.f32 0.0, %v230
    %232 = vmatmul.f32.gmra.mxu0 %v170
    %v233 = vpop.f32.mrf.mxu0
    %v234 = vadd.f32 0.0, %v233
    %235 = vdwg.mxu0
    %v236 = vld [vmem:[%s1 + $0x80] sm:$0xff]
    %v237 = vld [vmem:[%s1 + $0x88] sm:$0xff]
    %v238 = vld [vmem:[%s1 + $0x90] sm:$0xff]
    %v239 = vld [vmem:[%s1 + $0x98] sm:$0xff]
    %v240 = vld [vmem:[%s1 + $0xa0] sm:$0xff]
    %v241 = vld [vmem:[%s1 + $0xa8] sm:$0xff]
    %v242 = vld [vmem:[%s1 + $0xb0] sm:$0xff]
    %v243 = vld [vmem:[%s1 + $0xb8] sm:$0xff]
    %v244 = vld [vmem:[%s1 + $0xc0] sm:$0xff]
    %v245 = vld [vmem:[%s1 + $0xc8] sm:$0xff]
    %v246 = vld [vmem:[%s1 + $0xd0] sm:$0xff]
    %v247 = vld [vmem:[%s1 + $0xd8] sm:$0xff]
    %v248 = vld [vmem:[%s1 + $0xe0] sm:$0xff]
    %v249 = vld [vmem:[%s1 + $0xe8] sm:$0xff]
    %v250 = vld [vmem:[%s1 + $0xf0] sm:$0xff]
    %v251 = vld [vmem:[%s1 + $0xf8] sm:$0xff]
    %252 = vmatpush.msra.mxu0 %v154
    %253 = vmatpush.msra.mxu0 %v153
    %254 = vmatpush.msra.mxu0 %v152
    %255 = vmatpush.msra.mxu0 %v151
    %256 = vmatpush.msra.mxu0 %v150
    %257 = vmatpush.msra.mxu0 %v149
    %258 = vmatpush.msra.mxu0 %v148
    %259 = vmatpush.msra.mxu0 %v147
    %260 = vmatpush.msra.mxu0 %v146
    %261 = vmatpush.msra.mxu0 %v145
    %262 = vmatpush.msra.mxu0 %v144
    %263 = vmatpush.msra.mxu0 %v143
    %264 = vmatpush.msra.mxu0 %v142
    %265 = vmatpush.msra.mxu0 %v141
    %266 = vmatpush.msra.mxu0 %v140
    %267 = vmatpush.msra.mxu0 %v139
    %268 = vmatmul.f32.gmra.mxu0 %v236
    %v269 = vpop.f32.mrf.mxu0
    %v270 = vadd.f32 0.0, %v269
    %271 = vmatmul.f32.gmra.mxu0 %v237
    %v272 = vpop.f32.mrf.mxu0
    %v273 = vadd.f32 0.0, %v272
    %274 = vmatmul.f32.gmra.mxu0 %v238
    %v275 = vpop.f32.mrf.mxu0
    %v276 = vadd.f32 0.0, %v275
    %277 = vmatmul.f32.gmra.mxu0 %v239
    %v278 = vpop.f32.mrf.mxu0
    %v279 = vadd.f32 0.0, %v278
    %280 = vmatmul.f32.gmra.mxu0 %v240
    %v281 = vpop.f32.mrf.mxu0
    %v282 = vadd.f32 0.0, %v281
    %283 = vmatmul.f32.gmra.mxu0 %v241
    %v284 = vpop.f32.mrf.mxu0
    %v285 = vadd.f32 0.0, %v284
    %286 = vmatmul.f32.gmra.mxu0 %v242
    %v287 = vpop.f32.mrf.mxu0
    %v288 = vadd.f32 0.0, %v287
    %289 = vmatmul.f32.gmra.mxu0 %v243
    %v290 = vpop.f32.mrf.mxu0
    %v291 = vadd.f32 0.0, %v290
    %292 = vmatmul.f32.gmra.mxu0 %v244
    %v293 = vpop.f32.mrf.mxu0
    %v294 = vadd.f32 0.0, %v293
    %295 = vmatmul.f32.gmra.mxu0 %v245
    %v296 = vpop.f32.mrf.mxu0
    %v297 = vadd.f32 0.0, %v296
    %298 = vmatmul.f32.gmra.mxu0 %v246
    %v299 = vpop.f32.mrf.mxu0
    %v300 = vadd.f32 0.0, %v299
    %301 = vmatmul.f32.gmra.mxu0 %v247
    %v302 = vpop.f32.mrf.mxu0
    %v303 = vadd.f32 0.0, %v302
    %304 = vmatmul.f32.gmra.mxu0 %v248
    %v305 = vpop.f32.mrf.mxu0
    %v306 = vadd.f32 0.0, %v305
    %307 = vmatmul.f32.gmra.mxu0 %v249
    %v308 = vpop.f32.mrf.mxu0
    %v309 = vadd.f32 0.0, %v308
    %310 = vmatmul.f32.gmra.mxu0 %v250
    %v311 = vpop.f32.mrf.mxu0
    %v312 = vadd.f32 0.0, %v311
    %313 = vmatmul.f32.gmra.mxu0 %v251
    %v314 = vpop.f32.mrf.mxu0
    %v315 = vadd.f32 0.0, %v314
    %316 = vdwg.mxu0
    %v317 = vld [vmem:[#allocation2] sm:$0xff]
    %v318 = vld [vmem:[#allocation2 + $0x8] sm:$0xff]
    %v319 = vld [vmem:[#allocation2 + $0x10] sm:$0xff]
    %v320 = vld [vmem:[#allocation2 + $0x18] sm:$0xff]
    %v321 = vld [vmem:[#allocation2 + $0x20] sm:$0xff]
    %v322 = vld [vmem:[#allocation2 + $0x28] sm:$0xff]
    %v323 = vld [vmem:[#allocation2 + $0x30] sm:$0xff]
    %v324 = vld [vmem:[#allocation2 + $0x38] sm:$0xff]
    %vm325 = vcmask 130048
    %v327 = vsel %vm325, %v139, 0
    %v330 = vsel %vm325, %v140, 0
    %v333 = vsel %vm325, %v141, 0
    %v336 = vsel %vm325, %v142, 0
    %v339 = vsel %vm325, %v143, 0
    %v342 = vsel %vm325, %v144, 0
    %v345 = vsel %vm325, %v145, 0
    %v348 = vsel %vm325, %v146, 0
    %v351 = vsel %vm325, %v147, 0
    %v354 = vsel %vm325, %v148, 0
    %v357 = vsel %vm325, %v149, 0
    %v360 = vsel %vm325, %v150, 0
    %v363 = vsel %vm325, %v151, 0
    %v366 = vsel %vm325, %v152, 0
    %v369 = vsel %vm325, %v153, 0
    %v372 = vsel %vm325, %v154, 0
    %374 = vmatpush.msra.mxu0 0.0
    %375 = vmatpush.msra.mxu0 0.0
    %376 = vmatpush.msra.mxu0 0.0
    %377 = vmatpush.msra.mxu0 0.0
    %378 = vmatpush.msra.mxu0 0.0
    %379 = vmatpush.msra.mxu0 0.0
    %380 = vmatpush.msra.mxu0 0.0
    %381 = vmatpush.msra.mxu0 0.0
    %382 = vmatpush.msra.mxu0 0.0
    %383 = vmatpush.msra.mxu0 0.0
    %384 = vmatpush.msra.mxu0 0.0
    %385 = vmatpush.msra.mxu0 0.0
    %386 = vmatpush.msra.mxu0 0.0
    %387 = vmatpush.msra.mxu0 0.0
    %388 = vmatpush.msra.mxu0 %v323
    %389 = vmatpush.msra.mxu0 %v321
    %390 = vmatmul.f32.gmra.mxu0 %v327
    %v391 = vpop.f32.mrf.mxu0
    %v392 = vadd.f32 0.0, %v391
    %393 = vmatmul.f32.gmra.mxu0 %v330
    %v394 = vpop.f32.mrf.mxu0
    %v395 = vadd.f32 0.0, %v394
    %396 = vmatmul.f32.gmra.mxu0 %v333
    %v397 = vpop.f32.mrf.mxu0
    %v398 = vadd.f32 0.0, %v397
    %399 = vmatmul.f32.gmra.mxu0 %v336
    %v400 = vpop.f32.mrf.mxu0
    %v401 = vadd.f32 0.0, %v400
    %402 = vmatmul.f32.gmra.mxu0 %v339
    %v403 = vpop.f32.mrf.mxu0
    %v404 = vadd.f32 0.0, %v403
    %405 = vmatmul.f32.gmra.mxu0 %v342
    %v406 = vpop.f32.mrf.mxu0
    %v407 = vadd.f32 0.0, %v406
    %408 = vmatmul.f32.gmra.mxu0 %v345
    %v409 = vpop.f32.mrf.mxu0
    %v410 = vadd.f32 0.0, %v409
    %411 = vmatmul.f32.gmra.mxu0 %v348
    %v412 = vpop.f32.mrf.mxu0
    %v413 = vadd.f32 0.0, %v412
    %414 = vmatmul.f32.gmra.mxu0 %v351
    %v415 = vpop.f32.mrf.mxu0
    %v416 = vadd.f32 0.0, %v415
    %417 = vmatmul.f32.gmra.mxu0 %v354
    %v418 = vpop.f32.mrf.mxu0
    %v419 = vadd.f32 0.0, %v418
    %420 = vmatmul.f32.gmra.mxu0 %v357
    %v421 = vpop.f32.mrf.mxu0
    %v422 = vadd.f32 0.0, %v421
    %423 = vmatmul.f32.gmra.mxu0 %v360
    %v424 = vpop.f32.mrf.mxu0
    %v425 = vadd.f32 0.0, %v424
    %426 = vmatmul.f32.gmra.mxu0 %v363
    %v427 = vpop.f32.mrf.mxu0
    %v428 = vadd.f32 0.0, %v427
    %429 = vmatmul.f32.gmra.mxu0 %v366
    %v430 = vpop.f32.mrf.mxu0
    %v431 = vadd.f32 0.0, %v430
    %432 = vmatmul.f32.gmra.mxu0 %v369
    %v433 = vpop.f32.mrf.mxu0
    %v434 = vadd.f32 0.0, %v433
    %435 = vmatmul.f32.gmra.mxu0 %v372
    %v436 = vpop.f32.mrf.mxu0
    %v437 = vadd.f32 0.0, %v436
    %438 = vdwg.mxu0
    %439 = vmatpush.msra.mxu0 0.0
    %440 = vmatpush.msra.mxu0 0.0
    %441 = vmatpush.msra.mxu0 0.0
    %442 = vmatpush.msra.mxu0 0.0
    %443 = vmatpush.msra.mxu0 0.0
    %444 = vmatpush.msra.mxu0 0.0
    %445 = vmatpush.msra.mxu0 0.0
    %446 = vmatpush.msra.mxu0 0.0
    %447 = vmatpush.msra.mxu0 0.0
    %448 = vmatpush.msra.mxu0 0.0
    %449 = vmatpush.msra.mxu0 0.0
    %450 = vmatpush.msra.mxu0 0.0
    %451 = vmatpush.msra.mxu0 0.0
    %452 = vmatpush.msra.mxu0 0.0
    %453 = vmatpush.msra.mxu0 %v324
    %454 = vmatpush.msra.mxu0 %v322
    %455 = vmatmul.f32.gmra.mxu0 %v327
    %v456 = vpop.f32.mrf.mxu0
    %v457 = vadd.f32 0.0, %v456
    %458 = vmatmul.f32.gmra.mxu0 %v330
    %v459 = vpop.f32.mrf.mxu0
    %v460 = vadd.f32 0.0, %v459
    %461 = vmatmul.f32.gmra.mxu0 %v333
    %v462 = vpop.f32.mrf.mxu0
    %v463 = vadd.f32 0.0, %v462
    %464 = vmatmul.f32.gmra.mxu0 %v336
    %v465 = vpop.f32.mrf.mxu0
    %v466 = vadd.f32 0.0, %v465
    %467 = vmatmul.f32.gmra.mxu0 %v339
    %v468 = vpop.f32.mrf.mxu0
    %v469 = vadd.f32 0.0, %v468
    %470 = vmatmul.f32.gmra.mxu0 %v342
    %v471 = vpop.f32.mrf.mxu0
    %v472 = vadd.f32 0.0, %v471
    %473 = vmatmul.f32.gmra.mxu0 %v345
    %v474 = vpop.f32.mrf.mxu0
    %v475 = vadd.f32 0.0, %v474
    %476 = vmatmul.f32.gmra.mxu0 %v348
    %v477 = vpop.f32.mrf.mxu0
    %v478 = vadd.f32 0.0, %v477
    %479 = vmatmul.f32.gmra.mxu0 %v351
    %v480 = vpop.f32.mrf.mxu0
    %v481 = vadd.f32 0.0, %v480
    %482 = vmatmul.f32.gmra.mxu0 %v354
    %v483 = vpop.f32.mrf.mxu0
    %v484 = vadd.f32 0.0, %v483
    %485 = vmatmul.f32.gmra.mxu0 %v357
    %v486 = vpop.f32.mrf.mxu0
    %v487 = vadd.f32 0.0, %v486
    %488 = vmatmul.f32.gmra.mxu0 %v360
    %v489 = vpop.f32.mrf.mxu0
    %v490 = vadd.f32 0.0, %v489
    %491 = vmatmul.f32.gmra.mxu0 %v363
    %v492 = vpop.f32.mrf.mxu0
    %v493 = vadd.f32 0.0, %v492
    %494 = vmatmul.f32.gmra.mxu0 %v366
    %v495 = vpop.f32.mrf.mxu0
    %v496 = vadd.f32 0.0, %v495
    %497 = vmatmul.f32.gmra.mxu0 %v369
    %v498 = vpop.f32.mrf.mxu0
    %v499 = vadd.f32 0.0, %v498
    %500 = vmatmul.f32.gmra.mxu0 %v372
    %v501 = vpop.f32.mrf.mxu0
    %v502 = vadd.f32 0.0, %v501
    %503 = vdwg.mxu0
    %v505 = vsel %vm325, %v189, 0
    %v508 = vsel %vm325, %v192, 0
    %v511 = vsel %vm325, %v195, 0
    %v514 = vsel %vm325, %v198, 0
    %v517 = vsel %vm325, %v201, 0
    %v520 = vsel %vm325, %v204, 0
    %v523 = vsel %vm325, %v207, 0
    %v526 = vsel %vm325, %v210, 0
    %v529 = vsel %vm325, %v213, 0
    %v532 = vsel %vm325, %v216, 0
    %v535 = vsel %vm325, %v219, 0
    %v538 = vsel %vm325, %v222, 0
    %v541 = vsel %vm325, %v225, 0
    %v544 = vsel %vm325, %v228, 0
    %v547 = vsel %vm325, %v231, 0
    %v550 = vsel %vm325, %v234, 0
    %552 = vmatpush.msra.mxu0 0.0
    %553 = vmatpush.msra.mxu0 0.0
    %554 = vmatpush.msra.mxu0 0.0
    %555 = vmatpush.msra.mxu0 0.0
    %556 = vmatpush.msra.mxu0 0.0
    %557 = vmatpush.msra.mxu0 0.0
    %558 = vmatpush.msra.mxu0 0.0
    %559 = vmatpush.msra.mxu0 0.0
    %560 = vmatpush.msra.mxu0 0.0
    %561 = vmatpush.msra.mxu0 0.0
    %562 = vmatpush.msra.mxu0 0.0
    %563 = vmatpush.msra.mxu0 0.0
    %564 = vmatpush.msra.mxu0 0.0
    %565 = vmatpush.msra.mxu0 0.0
    %566 = vmatpush.msra.mxu0 %v319
    %567 = vmatpush.msra.mxu0 %v317
    %568 = vmatmul.f32.gmra.mxu0 %v505
    %v569 = vpop.f32.mrf.mxu0
    %v570 = vadd.f32 %v392, %v569
    %571 = vmatmul.f32.gmra.mxu0 %v508
    %v572 = vpop.f32.mrf.mxu0
    %v573 = vadd.f32 %v395, %v572
    %574 = vmatmul.f32.gmra.mxu0 %v511
    %v575 = vpop.f32.mrf.mxu0
    %v576 = vadd.f32 %v398, %v575
    %577 = vmatmul.f32.gmra.mxu0 %v514
    %v578 = vpop.f32.mrf.mxu0
    %v579 = vadd.f32 %v401, %v578
    %580 = vmatmul.f32.gmra.mxu0 %v517
    %v581 = vpop.f32.mrf.mxu0
    %v582 = vadd.f32 %v404, %v581
    %583 = vmatmul.f32.gmra.mxu0 %v520
    %v584 = vpop.f32.mrf.mxu0
    %v585 = vadd.f32 %v407, %v584
    %586 = vmatmul.f32.gmra.mxu0 %v523
    %v587 = vpop.f32.mrf.mxu0
    %v588 = vadd.f32 %v410, %v587
    %589 = vmatmul.f32.gmra.mxu0 %v526
    %v590 = vpop.f32.mrf.mxu0
    %v591 = vadd.f32 %v413, %v590
    %592 = vmatmul.f32.gmra.mxu0 %v529
    %v593 = vpop.f32.mrf.mxu0
    %v594 = vadd.f32 %v416, %v593
    %595 = vmatmul.f32.gmra.mxu0 %v532
    %v596 = vpop.f32.mrf.mxu0
    %v597 = vadd.f32 %v419, %v596
    %598 = vmatmul.f32.gmra.mxu0 %v535
    %v599 = vpop.f32.mrf.mxu0
    %v600 = vadd.f32 %v422, %v599
    %601 = vmatmul.f32.gmra.mxu0 %v538
    %v602 = vpop.f32.mrf.mxu0
    %v603 = vadd.f32 %v425, %v602
    %604 = vmatmul.f32.gmra.mxu0 %v541
    %v605 = vpop.f32.mrf.mxu0
    %v606 = vadd.f32 %v428, %v605
    %607 = vmatmul.f32.gmra.mxu0 %v544
    %v608 = vpop.f32.mrf.mxu0
    %v609 = vadd.f32 %v431, %v608
    %610 = vmatmul.f32.gmra.mxu0 %v547
    %v611 = vpop.f32.mrf.mxu0
    %v612 = vadd.f32 %v434, %v611
    %613 = vmatmul.f32.gmra.mxu0 %v550
    %v614 = vpop.f32.mrf.mxu0
    %v615 = vadd.f32 %v437, %v614
    %616 = vdwg.mxu0
    %617 = vmatpush.msra.mxu0 0.0
    %618 = vmatpush.msra.mxu0 0.0
    %619 = vmatpush.msra.mxu0 0.0
    %620 = vmatpush.msra.mxu0 0.0
    %621 = vmatpush.msra.mxu0 0.0
    %622 = vmatpush.msra.mxu0 0.0
    %623 = vmatpush.msra.mxu0 0.0
    %624 = vmatpush.msra.mxu0 0.0
    %625 = vmatpush.msra.mxu0 0.0
    %626 = vmatpush.msra.mxu0 0.0
    %627 = vmatpush.msra.mxu0 0.0
    %628 = vmatpush.msra.mxu0 0.0
    %629 = vmatpush.msra.mxu0 0.0
    %630 = vmatpush.msra.mxu0 0.0
    %631 = vmatpush.msra.mxu0 %v320
    %632 = vmatpush.msra.mxu0 %v318
    %633 = vmatmul.f32.gmra.mxu0 %v505
    %v634 = vpop.f32.mrf.mxu0
    %v635 = vadd.f32 %v457, %v634
    %636 = vmatmul.f32.gmra.mxu0 %v508
    %v637 = vpop.f32.mrf.mxu0
    %v638 = vadd.f32 %v460, %v637
    %639 = vmatmul.f32.gmra.mxu0 %v511
    %v640 = vpop.f32.mrf.mxu0
    %v641 = vadd.f32 %v463, %v640
    %642 = vmatmul.f32.gmra.mxu0 %v514
    %v643 = vpop.f32.mrf.mxu0
    %v644 = vadd.f32 %v466, %v643
    %645 = vmatmul.f32.gmra.mxu0 %v517
    %v646 = vpop.f32.mrf.mxu0
    %v647 = vadd.f32 %v469, %v646
    %648 = vmatmul.f32.gmra.mxu0 %v520
    %v649 = vpop.f32.mrf.mxu0
    %v650 = vadd.f32 %v472, %v649
    %651 = vmatmul.f32.gmra.mxu0 %v523
    %v652 = vpop.f32.mrf.mxu0
    %v653 = vadd.f32 %v475, %v652
    %654 = vmatmul.f32.gmra.mxu0 %v526
    %v655 = vpop.f32.mrf.mxu0
    %v656 = vadd.f32 %v478, %v655
    %657 = vmatmul.f32.gmra.mxu0 %v529
    %v658 = vpop.f32.mrf.mxu0
    %v659 = vadd.f32 %v481, %v658
    %660 = vmatmul.f32.gmra.mxu0 %v532
    %v661 = vpop.f32.mrf.mxu0
    %v662 = vadd.f32 %v484, %v661
    %663 = vmatmul.f32.gmra.mxu0 %v535
    %v664 = vpop.f32.mrf.mxu0
    %v665 = vadd.f32 %v487, %v664
    %666 = vmatmul.f32.gmra.mxu0 %v538
    %v667 = vpop.f32.mrf.mxu0
    %v668 = vadd.f32 %v490, %v667
    %669 = vmatmul.f32.gmra.mxu0 %v541
    %v670 = vpop.f32.mrf.mxu0
    %v671 = vadd.f32 %v493, %v670
    %672 = vmatmul.f32.gmra.mxu0 %v544
    %v673 = vpop.f32.mrf.mxu0
    %v674 = vadd.f32 %v496, %v673
    %675 = vmatmul.f32.gmra.mxu0 %v547
    %v676 = vpop.f32.mrf.mxu0
    %v677 = vadd.f32 %v499, %v676
    %678 = vmatmul.f32.gmra.mxu0 %v550
    %v679 = vpop.f32.mrf.mxu0
    %v680 = vadd.f32 %v502, %v679
    %681 = vdwg.mxu0
    %v682 = vld [vmem:[#allocation2 + $0x40] sm:$0xff]
    %v683 = vld [vmem:[#allocation2 + $0x48] sm:$0xff]
    %v684 = vld [vmem:[#allocation2 + $0x50] sm:$0xff]
    %v685 = vld [vmem:[#allocation2 + $0x58] sm:$0xff]
    %v687 = vsel %vm325, %v270, 0
    %v690 = vsel %vm325, %v273, 0
    %v693 = vsel %vm325, %v276, 0
    %v696 = vsel %vm325, %v279, 0
    %v699 = vsel %vm325, %v282, 0
    %v702 = vsel %vm325, %v285, 0
    %v705 = vsel %vm325, %v288, 0
    %v708 = vsel %vm325, %v291, 0
    %v711 = vsel %vm325, %v294, 0
    %v714 = vsel %vm325, %v297, 0
    %v717 = vsel %vm325, %v300, 0
    %v720 = vsel %vm325, %v303, 0
    %v723 = vsel %vm325, %v306, 0
    %v726 = vsel %vm325, %v309, 0
    %v729 = vsel %vm325, %v312, 0
    %v732 = vsel %vm325, %v315, 0
    %734 = vmatpush.msra.mxu0 0.0
    %735 = vmatpush.msra.mxu0 0.0
    %736 = vmatpush.msra.mxu0 0.0
    %737 = vmatpush.msra.mxu0 0.0
    %738 = vmatpush.msra.mxu0 0.0
    %739 = vmatpush.msra.mxu0 0.0
    %740 = vmatpush.msra.mxu0 0.0
    %741 = vmatpush.msra.mxu0 0.0
    %742 = vmatpush.msra.mxu0 0.0
    %743 = vmatpush.msra.mxu0 0.0
    %744 = vmatpush.msra.mxu0 0.0
    %745 = vmatpush.msra.mxu0 0.0
    %746 = vmatpush.msra.mxu0 0.0
    %747 = vmatpush.msra.mxu0 0.0
    %748 = vmatpush.msra.mxu0 %v684
    %749 = vmatpush.msra.mxu0 %v682
    %750 = vmatmul.f32.gmra.mxu0 %v687
    %v751 = vpop.f32.mrf.mxu0
    %v752 = vadd.f32 0.0, %v751
    %753 = vmatmul.f32.gmra.mxu0 %v690
    %v754 = vpop.f32.mrf.mxu0
    %v755 = vadd.f32 0.0, %v754
    %756 = vmatmul.f32.gmra.mxu0 %v693
    %v757 = vpop.f32.mrf.mxu0
    %v758 = vadd.f32 0.0, %v757
    %759 = vmatmul.f32.gmra.mxu0 %v696
    %v760 = vpop.f32.mrf.mxu0
    %v761 = vadd.f32 0.0, %v760
    %762 = vmatmul.f32.gmra.mxu0 %v699
    %v763 = vpop.f32.mrf.mxu0
    %v764 = vadd.f32 0.0, %v763
    %765 = vmatmul.f32.gmra.mxu0 %v702
    %v766 = vpop.f32.mrf.mxu0
    %v767 = vadd.f32 0.0, %v766
    %768 = vmatmul.f32.gmra.mxu0 %v705
    %v769 = vpop.f32.mrf.mxu0
    %v770 = vadd.f32 0.0, %v769
    %771 = vmatmul.f32.gmra.mxu0 %v708
    %v772 = vpop.f32.mrf.mxu0
    %v773 = vadd.f32 0.0, %v772
    %774 = vmatmul.f32.gmra.mxu0 %v711
    %v775 = vpop.f32.mrf.mxu0
    %v776 = vadd.f32 0.0, %v775
    %777 = vmatmul.f32.gmra.mxu0 %v714
    %v778 = vpop.f32.mrf.mxu0
    %v779 = vadd.f32 0.0, %v778
    %780 = vmatmul.f32.gmra.mxu0 %v717
    %v781 = vpop.f32.mrf.mxu0
    %v782 = vadd.f32 0.0, %v781
    %783 = vmatmul.f32.gmra.mxu0 %v720
    %v784 = vpop.f32.mrf.mxu0
    %v785 = vadd.f32 0.0, %v784
    %786 = vmatmul.f32.gmra.mxu0 %v723
    %v787 = vpop.f32.mrf.mxu0
    %v788 = vadd.f32 0.0, %v787
    %789 = vmatmul.f32.gmra.mxu0 %v726
    %v790 = vpop.f32.mrf.mxu0
    %v791 = vadd.f32 0.0, %v790
    %792 = vmatmul.f32.gmra.mxu0 %v729
    %v793 = vpop.f32.mrf.mxu0
    %v794 = vadd.f32 0.0, %v793
    %795 = vmatmul.f32.gmra.mxu0 %v732
    %v796 = vpop.f32.mrf.mxu0
    %v797 = vadd.f32 0.0, %v796
    %798 = vdwg.mxu0
    %799 = vmatpush.msra.mxu0 0.0
    %800 = vmatpush.msra.mxu0 0.0
    %801 = vmatpush.msra.mxu0 0.0
    %802 = vmatpush.msra.mxu0 0.0
    %803 = vmatpush.msra.mxu0 0.0
    %804 = vmatpush.msra.mxu0 0.0
    %805 = vmatpush.msra.mxu0 0.0
    %806 = vmatpush.msra.mxu0 0.0
    %807 = vmatpush.msra.mxu0 0.0
    %808 = vmatpush.msra.mxu0 0.0
    %809 = vmatpush.msra.mxu0 0.0
    %810 = vmatpush.msra.mxu0 0.0
    %811 = vmatpush.msra.mxu0 0.0
    %812 = vmatpush.msra.mxu0 0.0
    %813 = vmatpush.msra.mxu0 %v685
    %814 = vmatpush.msra.mxu0 %v683
    %815 = vmatmul.f32.gmra.mxu0 %v687
    %v816 = vpop.f32.mrf.mxu0
    %v817 = vadd.f32 0.0, %v816
    %818 = vmatmul.f32.gmra.mxu0 %v690
    %v819 = vpop.f32.mrf.mxu0
    %v820 = vadd.f32 0.0, %v819
    %821 = vmatmul.f32.gmra.mxu0 %v693
    %v822 = vpop.f32.mrf.mxu0
    %v823 = vadd.f32 0.0, %v822
    %824 = vmatmul.f32.gmra.mxu0 %v696
    %v825 = vpop.f32.mrf.mxu0
    %v826 = vadd.f32 0.0, %v825
    %827 = vmatmul.f32.gmra.mxu0 %v699
    %v828 = vpop.f32.mrf.mxu0
    %v829 = vadd.f32 0.0, %v828
    %830 = vmatmul.f32.gmra.mxu0 %v702
    %v831 = vpop.f32.mrf.mxu0
    %v832 = vadd.f32 0.0, %v831
    %833 = vmatmul.f32.gmra.mxu0 %v705
    %v834 = vpop.f32.mrf.mxu0
    %v835 = vadd.f32 0.0, %v834
    %836 = vmatmul.f32.gmra.mxu0 %v708
    %v837 = vpop.f32.mrf.mxu0
    %v838 = vadd.f32 0.0, %v837
    %839 = vmatmul.f32.gmra.mxu0 %v711
    %v840 = vpop.f32.mrf.mxu0
    %v841 = vadd.f32 0.0, %v840
    %842 = vmatmul.f32.gmra.mxu0 %v714
    %v843 = vpop.f32.mrf.mxu0
    %v844 = vadd.f32 0.0, %v843
    %845 = vmatmul.f32.gmra.mxu0 %v717
    %v846 = vpop.f32.mrf.mxu0
    %v847 = vadd.f32 0.0, %v846
    %848 = vmatmul.f32.gmra.mxu0 %v720
    %v849 = vpop.f32.mrf.mxu0
    %v850 = vadd.f32 0.0, %v849
    %851 = vmatmul.f32.gmra.mxu0 %v723
    %v852 = vpop.f32.mrf.mxu0
    %v853 = vadd.f32 0.0, %v852
    %854 = vmatmul.f32.gmra.mxu0 %v726
    %v855 = vpop.f32.mrf.mxu0
    %v856 = vadd.f32 0.0, %v855
    %857 = vmatmul.f32.gmra.mxu0 %v729
    %v858 = vpop.f32.mrf.mxu0
    %v859 = vadd.f32 0.0, %v858
    %860 = vmatmul.f32.gmra.mxu0 %v732
    %v861 = vpop.f32.mrf.mxu0
    %v862 = vadd.f32 0.0, %v861
    %863 = vdwg.mxu0
    %v864 = vadd.f32 %v570, %v752
    %v865 = vadd.f32 %v635, %v817
    %v866 = vadd.f32 %v573, %v755
    %v867 = vadd.f32 %v638, %v820
    %v868 = vadd.f32 %v576, %v758
    %v869 = vadd.f32 %v641, %v823
    %v870 = vadd.f32 %v579, %v761
    %v871 = vadd.f32 %v644, %v826
    %v872 = vadd.f32 %v582, %v764
    %v873 = vadd.f32 %v647, %v829
    %v874 = vadd.f32 %v585, %v767
    %v875 = vadd.f32 %v650, %v832
    %v876 = vadd.f32 %v588, %v770
    %v877 = vadd.f32 %v653, %v835
    %v878 = vadd.f32 %v591, %v773
    %v879 = vadd.f32 %v656, %v838
    %v880 = vadd.f32 %v594, %v776
    %v881 = vadd.f32 %v659, %v841
    %v882 = vadd.f32 %v597, %v779
    %v883 = vadd.f32 %v662, %v844
    %v884 = vadd.f32 %v600, %v782
    %v885 = vadd.f32 %v665, %v847
    %v886 = vadd.f32 %v603, %v785
    %v887 = vadd.f32 %v668, %v850
    %v888 = vadd.f32 %v606, %v788
    %v889 = vadd.f32 %v671, %v853
    %v890 = vadd.f32 %v609, %v791
    %v891 = vadd.f32 %v674, %v856
    %v892 = vadd.f32 %v612, %v794
    %v893 = vadd.f32 %v677, %v859
    %v894 = vadd.f32 %v615, %v797
    %v895 = vadd.f32 %v680, %v862
    %v896 = vmax.f32 %v864, %v865
    %v897 = vmax.f32 %v866, %v867
    %v898 = vmax.f32 %v868, %v869
    %v899 = vmax.f32 %v870, %v871
    %v900 = vmax.f32 %v872, %v873
    %v901 = vmax.f32 %v874, %v875
    %v902 = vmax.f32 %v876, %v877
    %v903 = vmax.f32 %v878, %v879
    %v904 = vmax.f32 %v880, %v881
    %v905 = vmax.f32 %v882, %v883
    %v906 = vmax.f32 %v884, %v885
    %v907 = vmax.f32 %v886, %v887
    %v908 = vmax.f32 %v888, %v889
    %v909 = vmax.f32 %v890, %v891
    %v910 = vmax.f32 %v892, %v893
    %v911 = vmax.f32 %v894, %v895
    %v912 = vld [vmem:[%s3] sm:$0x1]
    %v914 = vperm.slane %v912, 0
    %v916 = vadd.f32 %v896, %v914
    %v917 = vadd.f32 %v897, %v914
    %v918 = vadd.f32 %v898, %v914
    %v919 = vadd.f32 %v899, %v914
    %v920 = vadd.f32 %v900, %v914
    %v921 = vadd.f32 %v901, %v914
    %v922 = vadd.f32 %v902, %v914
    %v923 = vadd.f32 %v903, %v914
    %v924 = vadd.f32 %v904, %v914
    %v925 = vadd.f32 %v905, %v914
    %v926 = vadd.f32 %v906, %v914
    %v927 = vadd.f32 %v907, %v914
    %v928 = vadd.f32 %v908, %v914
    %v929 = vadd.f32 %v909, %v914
    %v930 = vadd.f32 %v910, %v914
    %v931 = vadd.f32 %v911, %v914
    %v932 = vmax.f32 %v916, 0.0
    %v933 = vmax.f32 %v917, 0.0
    %v934 = vmax.f32 %v918, 0.0
    %v935 = vmax.f32 %v919, 0.0
    %v936 = vmax.f32 %v920, 0.0
    %v937 = vmax.f32 %v921, 0.0
    %v938 = vmax.f32 %v922, 0.0
    %v939 = vmax.f32 %v923, 0.0
    %v940 = vmax.f32 %v924, 0.0
    %v941 = vmax.f32 %v925, 0.0
    %v942 = vmax.f32 %v926, 0.0
    %v943 = vmax.f32 %v927, 0.0
    %v944 = vmax.f32 %v928, 0.0
    %v945 = vmax.f32 %v929, 0.0
    %v946 = vmax.f32 %v930, 0.0
    %v947 = vmax.f32 %v931, 0.0
    %v948 = vld [vmem:[#allocation7] sm:$0xff]
    %v949 = vld [vmem:[#allocation7 + $0x8] sm:$0xff]
    %v950 = vld [vmem:[#allocation7 + $0x10] sm:$0xff]
    %v951 = vld [vmem:[#allocation7 + $0x18] sm:$0xff]
    %v952 = vld [vmem:[#allocation7 + $0x20] sm:$0xff]
    %v953 = vld [vmem:[#allocation7 + $0x28] sm:$0xff]
    %v954 = vld [vmem:[#allocation7 + $0x30] sm:$0xff]
    %v955 = vld [vmem:[#allocation7 + $0x38] sm:$0xff]
    %956 = vmatpush.msra.mxu0 %v947
    %957 = vmatpush.msra.mxu0 %v946
    %958 = vmatpush.msra.mxu0 %v945
    %959 = vmatpush.msra.mxu0 %v944
    %960 = vmatpush.msra.mxu0 %v943
    %961 = vmatpush.msra.mxu0 %v942
    %962 = vmatpush.msra.mxu0 %v941
    %963 = vmatpush.msra.mxu0 %v940
    %964 = vmatpush.msra.mxu0 %v939
    %965 = vmatpush.msra.mxu0 %v938
    %966 = vmatpush.msra.mxu0 %v937
    %967 = vmatpush.msra.mxu0 %v936
    %968 = vmatpush.msra.mxu0 %v935
    %969 = vmatpush.msra.mxu0 %v934
    %970 = vmatpush.msra.mxu0 %v933
    %971 = vmatpush.msra.mxu0 %v932
    %972 = vmatmul.f32.gmra.mxu0 %v948
    %v973 = vpop.f32.mrf.mxu0
    %v974 = vadd.f32 0.0, %v973
    %975 = vmatmul.f32.gmra.mxu0 %v949
    %v976 = vpop.f32.mrf.mxu0
    %v977 = vadd.f32 0.0, %v976
    %978 = vmatmul.f32.gmra.mxu0 %v950
    %v979 = vpop.f32.mrf.mxu0
    %v980 = vadd.f32 0.0, %v979
    %981 = vmatmul.f32.gmra.mxu0 %v951
    %v982 = vpop.f32.mrf.mxu0
    %v983 = vadd.f32 0.0, %v982
    %984 = vmatmul.f32.gmra.mxu0 %v952
    %v985 = vpop.f32.mrf.mxu0
    %v986 = vadd.f32 0.0, %v985
    %987 = vmatmul.f32.gmra.mxu0 %v953
    %v988 = vpop.f32.mrf.mxu0
    %v989 = vadd.f32 0.0, %v988
    %990 = vmatmul.f32.gmra.mxu0 %v954
    %v991 = vpop.f32.mrf.mxu0
    %v992 = vadd.f32 0.0, %v991
    %993 = vmatmul.f32.gmra.mxu0 %v955
    %v994 = vpop.f32.mrf.mxu0
    %v995 = vadd.f32 0.0, %v994
    %996 = vdwg.mxu0
    %v997 = vld [vmem:[#allocation7 + $0x40] sm:$0xff]
    %v998 = vld [vmem:[#allocation7 + $0x48] sm:$0xff]
    %v999 = vld [vmem:[#allocation7 + $0x50] sm:$0xff]
    %v1000 = vld [vmem:[#allocation7 + $0x58] sm:$0xff]
    %v1001 = vld [vmem:[#allocation7 + $0x60] sm:$0xff]
    %v1002 = vld [vmem:[#allocation7 + $0x68] sm:$0xff]
    %v1003 = vld [vmem:[#allocation7 + $0x70] sm:$0xff]
    %v1004 = vld [vmem:[#allocation7 + $0x78] sm:$0xff]
    %1005 = vmatpush.msra.mxu0 %v947
    %1006 = vmatpush.msra.mxu0 %v946
    %1007 = vmatpush.msra.mxu0 %v945
    %1008 = vmatpush.msra.mxu0 %v944
    %1009 = vmatpush.msra.mxu0 %v943
    %1010 = vmatpush.msra.mxu0 %v942
    %1011 = vmatpush.msra.mxu0 %v941
    %1012 = vmatpush.msra.mxu0 %v940
    %1013 = vmatpush.msra.mxu0 %v939
    %1014 = vmatpush.msra.mxu0 %v938
    %1015 = vmatpush.msra.mxu0 %v937
    %1016 = vmatpush.msra.mxu0 %v936
    %1017 = vmatpush.msra.mxu0 %v935
    %1018 = vmatpush.msra.mxu0 %v934
    %1019 = vmatpush.msra.mxu0 %v933
    %1020 = vmatpush.msra.mxu0 %v932
    %1021 = vmatmul.f32.gmra.mxu0 %v997
    %v1022 = vpop.f32.mrf.mxu0
    %v1023 = vadd.f32 0.0, %v1022
    %1024 = vmatmul.f32.gmra.mxu0 %v998
    %v1025 = vpop.f32.mrf.mxu0
    %v1026 = vadd.f32 0.0, %v1025
    %1027 = vmatmul.f32.gmra.mxu0 %v999
    %v1028 = vpop.f32.mrf.mxu0
    %v1029 = vadd.f32 0.0, %v1028
    %1030 = vmatmul.f32.gmra.mxu0 %v1000
    %v1031 = vpop.f32.mrf.mxu0
    %v1032 = vadd.f32 0.0, %v1031
    %1033 = vmatmul.f32.gmra.mxu0 %v1001
    %v1034 = vpop.f32.mrf.mxu0
    %v1035 = vadd.f32 0.0, %v1034
    %1036 = vmatmul.f32.gmra.mxu0 %v1002
    %v1037 = vpop.f32.mrf.mxu0
    %v1038 = vadd.f32 0.0, %v1037
    %1039 = vmatmul.f32.gmra.mxu0 %v1003
    %v1040 = vpop.f32.mrf.mxu0
    %v1041 = vadd.f32 0.0, %v1040
    %1042 = vmatmul.f32.gmra.mxu0 %v1004
    %v1043 = vpop.f32.mrf.mxu0
    %v1044 = vadd.f32 0.0, %v1043
    %1045 = vdwg.mxu0
    %v1046 = vmax.f32 %v974, %v1023
    %v1047 = vmax.f32 %v977, %v1026
    %v1048 = vmax.f32 %v980, %v1029
    %v1049 = vmax.f32 %v983, %v1032
    %v1050 = vmax.f32 %v986, %v1035
    %v1051 = vmax.f32 %v989, %v1038
    %v1052 = vmax.f32 %v992, %v1041
    %v1053 = vmax.f32 %v995, %v1044
    %v1054 = vld [vmem:[%s4] sm:$0xff]
    %v1055 = vld [vmem:[%s4 + $0x8] sm:$0xff]
    %v1056 = vld [vmem:[%s4 + $0x10] sm:$0xff]
    %v1057 = vld [vmem:[%s4 + $0x18] sm:$0xff]
    %v1058 = vld [vmem:[%s4 + $0x20] sm:$0xff]
    %v1059 = vld [vmem:[%s4 + $0x28] sm:$0xff]
    %v1060 = vld [vmem:[%s4 + $0x30] sm:$0xff]
    %v1061 = vld [vmem:[%s4 + $0x38] sm:$0xff]
    %vm1062 = vcmask 523264
    %v1064 = vsel %vm1062, %v1054, 0
    %v1067 = vsel %vm1062, %v1055, 0
    %v1070 = vsel %vm1062, %v1056, 0
    %v1073 = vsel %vm1062, %v1057, 0
    %v1076 = vsel %vm1062, %v1058, 0
    %v1079 = vsel %vm1062, %v1059, 0
    %v1082 = vsel %vm1062, %v1060, 0
    %v1085 = vsel %vm1062, %v1061, 0
    %1087 = vmatpush.msra.mxu0 0.0
    %1088 = vmatpush.msra.mxu0 0.0
    %1089 = vmatpush.msra.mxu0 0.0
    %1090 = vmatpush.msra.mxu0 0.0
    %1091 = vmatpush.msra.mxu0 0.0
    %1092 = vmatpush.msra.mxu0 0.0
    %1093 = vmatpush.msra.mxu0 0.0
    %1094 = vmatpush.msra.mxu0 0.0
    %1095 = vmatpush.msra.mxu0 %v1053
    %1096 = vmatpush.msra.mxu0 %v1052
    %1097 = vmatpush.msra.mxu0 %v1051
    %1098 = vmatpush.msra.mxu0 %v1050
    %1099 = vmatpush.msra.mxu0 %v1049
    %1100 = vmatpush.msra.mxu0 %v1048
    %1101 = vmatpush.msra.mxu0 %v1047
    %1102 = vmatpush.msra.mxu0 %v1046
    %1103 = vmatmul.f32.gmra.mxu0 %v1064
    %v1104 = vpop.f32.mrf.mxu0
    %v1105 = vadd.f32 0.0, %v1104
    %1106 = vmatmul.f32.gmra.mxu0 %v1067
    %v1107 = vpop.f32.mrf.mxu0
    %v1108 = vadd.f32 0.0, %v1107
    %1109 = vmatmul.f32.gmra.mxu0 %v1070
    %v1110 = vpop.f32.mrf.mxu0
    %v1111 = vadd.f32 0.0, %v1110
    %1112 = vmatmul.f32.gmra.mxu0 %v1073
    %v1113 = vpop.f32.mrf.mxu0
    %v1114 = vadd.f32 0.0, %v1113
    %1115 = vmatmul.f32.gmra.mxu0 %v1076
    %v1116 = vpop.f32.mrf.mxu0
    %v1117 = vadd.f32 0.0, %v1116
    %1118 = vmatmul.f32.gmra.mxu0 %v1079
    %v1119 = vpop.f32.mrf.mxu0
    %v1120 = vadd.f32 0.0, %v1119
    %1121 = vmatmul.f32.gmra.mxu0 %v1082
    %v1122 = vpop.f32.mrf.mxu0
    %v1123 = vadd.f32 0.0, %v1122
    %1124 = vmatmul.f32.gmra.mxu0 %v1085
    %v1125 = vpop.f32.mrf.mxu0
    %v1126 = vadd.f32 0.0, %v1125
    %1127 = vdwg.mxu0
    %v1128 = vld [vmem:[%s4 + $0x40] sm:$0xff]
    %v1129 = vld [vmem:[%s4 + $0x48] sm:$0xff]
    %v1130 = vld [vmem:[%s4 + $0x50] sm:$0xff]
    %v1131 = vld [vmem:[%s4 + $0x58] sm:$0xff]
    %v1132 = vld [vmem:[%s4 + $0x60] sm:$0xff]
    %v1133 = vld [vmem:[%s4 + $0x68] sm:$0xff]
    %v1134 = vld [vmem:[%s4 + $0x70] sm:$0xff]
    %v1135 = vld [vmem:[%s4 + $0x78] sm:$0xff]
    %v1137 = vsel %vm1062, %v1128, 0
    %v1140 = vsel %vm1062, %v1129, 0
    %v1143 = vsel %vm1062, %v1130, 0
    %v1146 = vsel %vm1062, %v1131, 0
    %v1149 = vsel %vm1062, %v1132, 0
    %v1152 = vsel %vm1062, %v1133, 0
    %v1155 = vsel %vm1062, %v1134, 0
    %v1158 = vsel %vm1062, %v1135, 0
    %1160 = vmatpush.msra.mxu0 0.0
    %1161 = vmatpush.msra.mxu0 0.0
    %1162 = vmatpush.msra.mxu0 0.0
    %1163 = vmatpush.msra.mxu0 0.0
    %1164 = vmatpush.msra.mxu0 0.0
    %1165 = vmatpush.msra.mxu0 0.0
    %1166 = vmatpush.msra.mxu0 0.0
    %1167 = vmatpush.msra.mxu0 0.0
    %1168 = vmatpush.msra.mxu0 %v1053
    %1169 = vmatpush.msra.mxu0 %v1052
    %1170 = vmatpush.msra.mxu0 %v1051
    %1171 = vmatpush.msra.mxu0 %v1050
    %1172 = vmatpush.msra.mxu0 %v1049
    %1173 = vmatpush.msra.mxu0 %v1048
    %1174 = vmatpush.msra.mxu0 %v1047
    %1175 = vmatpush.msra.mxu0 %v1046
    %1176 = vmatmul.f32.gmra.mxu0 %v1137
    %v1177 = vpop.f32.mrf.mxu0
    %v1178 = vadd.f32 0.0, %v1177
    %1179 = vmatmul.f32.gmra.mxu0 %v1140
    %v1180 = vpop.f32.mrf.mxu0
    %v1181 = vadd.f32 0.0, %v1180
    %1182 = vmatmul.f32.gmra.mxu0 %v1143
    %v1183 = vpop.f32.mrf.mxu0
    %v1184 = vadd.f32 0.0, %v1183
    %1185 = vmatmul.f32.gmra.mxu0 %v1146
    %v1186 = vpop.f32.mrf.mxu0
    %v1187 = vadd.f32 0.0, %v1186
    %1188 = vmatmul.f32.gmra.mxu0 %v1149
    %v1189 = vpop.f32.mrf.mxu0
    %v1190 = vadd.f32 0.0, %v1189
    %1191 = vmatmul.f32.gmra.mxu0 %v1152
    %v1192 = vpop.f32.mrf.mxu0
    %v1193 = vadd.f32 0.0, %v1192
    %1194 = vmatmul.f32.gmra.mxu0 %v1155
    %v1195 = vpop.f32.mrf.mxu0
    %v1196 = vadd.f32 0.0, %v1195
    %1197 = vmatmul.f32.gmra.mxu0 %v1158
    %v1198 = vpop.f32.mrf.mxu0
    %v1199 = vadd.f32 0.0, %v1198
    %1200 = vdwg.mxu0
    %v1201 = vld [vmem:[#allocation5] sm:$0xff]
    %v1202 = vld [vmem:[#allocation5 + $0x8] sm:$0xff]
    %v1203 = vld [vmem:[#allocation5 + $0x10] sm:$0xff]
    %v1204 = vld [vmem:[#allocation5 + $0x18] sm:$0xff]
    %v1205 = vld [vmem:[#allocation5 + $0x20] sm:$0xff]
    %v1206 = vld [vmem:[#allocation5 + $0x28] sm:$0xff]
    %v1207 = vld [vmem:[#allocation5 + $0x30] sm:$0xff]
    %v1208 = vld [vmem:[#allocation5 + $0x38] sm:$0xff]
    %v1209 = vld [vmem:[#allocation5 + $0x40] sm:$0xff]
    %v1210 = vld [vmem:[#allocation5 + $0x48] sm:$0xff]
    %v1211 = vld [vmem:[#allocation5 + $0x50] sm:$0xff]
    %v1212 = vld [vmem:[#allocation5 + $0x58] sm:$0xff]
    %v1213 = vld [vmem:[#allocation5 + $0x60] sm:$0xff]
    %v1214 = vld [vmem:[#allocation5 + $0x68] sm:$0xff]
    %v1215 = vld [vmem:[#allocation5 + $0x70] sm:$0xff]
    %v1216 = vld [vmem:[#allocation5 + $0x78] sm:$0xff]
    %v1217 = vld [vmem:[#allocation5 + $0x80] sm:$0xff]
    %v1218 = vld [vmem:[#allocation5 + $0x88] sm:$0xff]
    %v1219 = vld [vmem:[#allocation5 + $0x90] sm:$0xff]
    %v1220 = vld [vmem:[#allocation5 + $0x98] sm:$0xff]
    %v1221 = vld [vmem:[#allocation5 + $0xa0] sm:$0xff]
    %v1222 = vld [vmem:[#allocation5 + $0xa8] sm:$0xff]
    %v1223 = vld [vmem:[#allocation5 + $0xb0] sm:$0xff]
    %v1224 = vld [vmem:[#allocation5 + $0xb8] sm:$0xff]
    %v1225 = vld [vmem:[#allocation5 + $0xc0] sm:$0xff]
    %v1226 = vld [vmem:[#allocation5 + $0xc8] sm:$0xff]
    %v1227 = vld [vmem:[#allocation5 + $0xd0] sm:$0xff]
    %v1228 = vld [vmem:[#allocation5 + $0xd8] sm:$0xff]
    %v1229 = vld [vmem:[#allocation5 + $0xe0] sm:$0xff]
    %v1230 = vld [vmem:[#allocation5 + $0xe8] sm:$0xff]
    %v1231 = vld [vmem:[#allocation5 + $0xf0] sm:$0xff]
    %v1232 = vld [vmem:[#allocation5 + $0xf8] sm:$0xff]
    %v1233 = vld [vmem:[#allocation5 + $0x100] sm:$0xff]
    %v1234 = vld [vmem:[#allocation5 + $0x108] sm:$0xff]
    %v1235 = vld [vmem:[#allocation5 + $0x110] sm:$0xff]
    %v1236 = vld [vmem:[#allocation5 + $0x118] sm:$0xff]
    %v1237 = vld [vmem:[#allocation5 + $0x120] sm:$0xff]
    %v1238 = vld [vmem:[#allocation5 + $0x128] sm:$0xff]
    %v1239 = vld [vmem:[#allocation5 + $0x130] sm:$0xff]
    %v1240 = vld [vmem:[#allocation5 + $0x138] sm:$0xff]
    %v1241 = vld [vmem:[#allocation5 + $0x140] sm:$0xff]
    %v1242 = vld [vmem:[#allocation5 + $0x148] sm:$0xff]
    %v1243 = vld [vmem:[#allocation5 + $0x150] sm:$0xff]
    %v1244 = vld [vmem:[#allocation5 + $0x158] sm:$0xff]
    %v1245 = vld [vmem:[#allocation5 + $0x160] sm:$0xff]
    %v1246 = vld [vmem:[#allocation5 + $0x168] sm:$0xff]
    %v1247 = vld [vmem:[#allocation5 + $0x170] sm:$0xff]
    %v1248 = vld [vmem:[#allocation5 + $0x178] sm:$0xff]
    %v1249 = vld [vmem:[#allocation5 + $0x180] sm:$0xff]
    %v1250 = vld [vmem:[#allocation5 + $0x188] sm:$0xff]
    %v1251 = vld [vmem:[#allocation5 + $0x190] sm:$0xff]
    %v1252 = vld [vmem:[#allocation5 + $0x198] sm:$0xff]
    %v1253 = vld [vmem:[#allocation5 + $0x1a0] sm:$0xff]
    %v1254 = vld [vmem:[#allocation5 + $0x1a8] sm:$0xff]
    %v1255 = vld [vmem:[#allocation5 + $0x1b0] sm:$0xff]
    %v1256 = vld [vmem:[#allocation5 + $0x1b8] sm:$0xff]
    %v1257 = vld [vmem:[#allocation5 + $0x1c0] sm:$0xff]
    %v1258 = vld [vmem:[#allocation5 + $0x1c8] sm:$0xff]
    %v1259 = vld [vmem:[#allocation5 + $0x1d0] sm:$0xff]
    %v1260 = vld [vmem:[#allocation5 + $0x1d8] sm:$0xff]
    %v1261 = vld [vmem:[#allocation5 + $0x1e0] sm:$0xff]
    %v1262 = vld [vmem:[#allocation5 + $0x1e8] sm:$0xff]
    %v1263 = vld [vmem:[#allocation5 + $0x1f0] sm:$0xff]
    %v1264 = vld [vmem:[#allocation5 + $0x1f8] sm:$0xff]
    %1265 = vmatpush.msra.mxu0 %v1263
    %1266 = vmatpush.msra.mxu0 %v1261
    %1267 = vmatpush.msra.mxu0 %v1259
    %1268 = vmatpush.msra.mxu0 %v1257
    %1269 = vmatpush.msra.mxu0 %v1255
    %1270 = vmatpush.msra.mxu0 %v1253
    %1271 = vmatpush.msra.mxu0 %v1251
    %1272 = vmatpush.msra.mxu0 %v1249
    %1273 = vmatpush.msra.mxu0 %v1247
    %1274 = vmatpush.msra.mxu0 %v1245
    %1275 = vmatpush.msra.mxu0 %v1243
    %1276 = vmatpush.msra.mxu0 %v1241
    %1277 = vmatpush.msra.mxu0 %v1239
    %1278 = vmatpush.msra.mxu0 %v1237
    %1279 = vmatpush.msra.mxu0 %v1235
    %1280 = vmatpush.msra.mxu0 %v1233
    %1281 = vmatmul.f32.gmra.mxu0 %v1046
    %v1282 = vpop.f32.mrf.mxu0
    %v1283 = vadd.f32 0.0, %v1282
    %1284 = vmatmul.f32.gmra.mxu0 %v1047
    %v1285 = vpop.f32.mrf.mxu0
    %v1286 = vadd.f32 0.0, %v1285
    %1287 = vmatmul.f32.gmra.mxu0 %v1048
    %v1288 = vpop.f32.mrf.mxu0
    %v1289 = vadd.f32 0.0, %v1288
    %1290 = vmatmul.f32.gmra.mxu0 %v1049
    %v1291 = vpop.f32.mrf.mxu0
    %v1292 = vadd.f32 0.0, %v1291
    %1293 = vmatmul.f32.gmra.mxu0 %v1050
    %v1294 = vpop.f32.mrf.mxu0
    %v1295 = vadd.f32 0.0, %v1294
    %1296 = vmatmul.f32.gmra.mxu0 %v1051
    %v1297 = vpop.f32.mrf.mxu0
    %v1298 = vadd.f32 0.0, %v1297
    %1299 = vmatmul.f32.gmra.mxu0 %v1052
    %v1300 = vpop.f32.mrf.mxu0
    %v1301 = vadd.f32 0.0, %v1300
    %1302 = vmatmul.f32.gmra.mxu0 %v1053
    %v1303 = vpop.f32.mrf.mxu0
    %v1304 = vadd.f32 0.0, %v1303
    %1305 = vdwg.mxu0
    %1306 = vmatpush.msra.mxu0 %v1264
    %1307 = vmatpush.msra.mxu0 %v1262
    %1308 = vmatpush.msra.mxu0 %v1260
    %1309 = vmatpush.msra.mxu0 %v1258
    %1310 = vmatpush.msra.mxu0 %v1256
    %1311 = vmatpush.msra.mxu0 %v1254
    %1312 = vmatpush.msra.mxu0 %v1252
    %1313 = vmatpush.msra.mxu0 %v1250
    %1314 = vmatpush.msra.mxu0 %v1248
    %1315 = vmatpush.msra.mxu0 %v1246
    %1316 = vmatpush.msra.mxu0 %v1244
    %1317 = vmatpush.msra.mxu0 %v1242
    %1318 = vmatpush.msra.mxu0 %v1240
    %1319 = vmatpush.msra.mxu0 %v1238
    %1320 = vmatpush.msra.mxu0 %v1236
    %1321 = vmatpush.msra.mxu0 %v1234
    %1322 = vmatmul.f32.gmra.mxu0 %v1046
    %v1323 = vpop.f32.mrf.mxu0
    %v1324 = vadd.f32 0.0, %v1323
    %1325 = vmatmul.f32.gmra.mxu0 %v1047
    %v1326 = vpop.f32.mrf.mxu0
    %v1327 = vadd.f32 0.0, %v1326
    %1328 = vmatmul.f32.gmra.mxu0 %v1048
    %v1329 = vpop.f32.mrf.mxu0
    %v1330 = vadd.f32 0.0, %v1329
    %1331 = vmatmul.f32.gmra.mxu0 %v1049
    %v1332 = vpop.f32.mrf.mxu0
    %v1333 = vadd.f32 0.0, %v1332
    %1334 = vmatmul.f32.gmra.mxu0 %v1050
    %v1335 = vpop.f32.mrf.mxu0
    %v1336 = vadd.f32 0.0, %v1335
    %1337 = vmatmul.f32.gmra.mxu0 %v1051
    %v1338 = vpop.f32.mrf.mxu0
    %v1339 = vadd.f32 0.0, %v1338
    %1340 = vmatmul.f32.gmra.mxu0 %v1052
    %v1341 = vpop.f32.mrf.mxu0
    %v1342 = vadd.f32 0.0, %v1341
    %1343 = vmatmul.f32.gmra.mxu0 %v1053
    %v1344 = vpop.f32.mrf.mxu0
    %v1345 = vadd.f32 0.0, %v1344
    %1346 = vdwg.mxu0
    %1347 = vmatpush.msra.mxu0 %v1231
    %1348 = vmatpush.msra.mxu0 %v1229
    %1349 = vmatpush.msra.mxu0 %v1227
    %1350 = vmatpush.msra.mxu0 %v1225
    %1351 = vmatpush.msra.mxu0 %v1223
    %1352 = vmatpush.msra.mxu0 %v1221
    %1353 = vmatpush.msra.mxu0 %v1219
    %1354 = vmatpush.msra.mxu0 %v1217
    %1355 = vmatpush.msra.mxu0 %v1215
    %1356 = vmatpush.msra.mxu0 %v1213
    %1357 = vmatpush.msra.mxu0 %v1211
    %1358 = vmatpush.msra.mxu0 %v1209
    %1359 = vmatpush.msra.mxu0 %v1207
    %1360 = vmatpush.msra.mxu0 %v1205
    %1361 = vmatpush.msra.mxu0 %v1203
    %1362 = vmatpush.msra.mxu0 %v1201
    %1363 = vmatmul.f32.gmra.mxu0 %v1105
    %v1364 = vpop.f32.mrf.mxu0
    %v1365 = vadd.f32 %v1283, %v1364
    %1366 = vmatmul.f32.gmra.mxu0 %v1108
    %v1367 = vpop.f32.mrf.mxu0
    %v1368 = vadd.f32 %v1286, %v1367
    %1369 = vmatmul.f32.gmra.mxu0 %v1111
    %v1370 = vpop.f32.mrf.mxu0
    %v1371 = vadd.f32 %v1289, %v1370
    %1372 = vmatmul.f32.gmra.mxu0 %v1114
    %v1373 = vpop.f32.mrf.mxu0
    %v1374 = vadd.f32 %v1292, %v1373
    %1375 = vmatmul.f32.gmra.mxu0 %v1117
    %v1376 = vpop.f32.mrf.mxu0
    %v1377 = vadd.f32 %v1295, %v1376
    %1378 = vmatmul.f32.gmra.mxu0 %v1120
    %v1379 = vpop.f32.mrf.mxu0
    %v1380 = vadd.f32 %v1298, %v1379
    %1381 = vmatmul.f32.gmra.mxu0 %v1123
    %v1382 = vpop.f32.mrf.mxu0
    %v1383 = vadd.f32 %v1301, %v1382
    %1384 = vmatmul.f32.gmra.mxu0 %v1126
    %v1385 = vpop.f32.mrf.mxu0
    %v1386 = vadd.f32 %v1304, %v1385
    %1387 = vdwg.mxu0
    %1388 = vmatpush.msra.mxu0 %v1232
    %1389 = vmatpush.msra.mxu0 %v1230
    %1390 = vmatpush.msra.mxu0 %v1228
    %1391 = vmatpush.msra.mxu0 %v1226
    %1392 = vmatpush.msra.mxu0 %v1224
    %1393 = vmatpush.msra.mxu0 %v1222
    %1394 = vmatpush.msra.mxu0 %v1220
    %1395 = vmatpush.msra.mxu0 %v1218
    %1396 = vmatpush.msra.mxu0 %v1216
    %1397 = vmatpush.msra.mxu0 %v1214
    %1398 = vmatpush.msra.mxu0 %v1212
    %1399 = vmatpush.msra.mxu0 %v1210
    %1400 = vmatpush.msra.mxu0 %v1208
    %1401 = vmatpush.msra.mxu0 %v1206
    %1402 = vmatpush.msra.mxu0 %v1204
    %1403 = vmatpush.msra.mxu0 %v1202
    %1404 = vmatmul.f32.gmra.mxu0 %v1105
    %v1405 = vpop.f32.mrf.mxu0
    %v1406 = vadd.f32 %v1324, %v1405
    %1407 = vmatmul.f32.gmra.mxu0 %v1108
    %v1408 = vpop.f32.mrf.mxu0
    %v1409 = vadd.f32 %v1327, %v1408
    %1410 = vmatmul.f32.gmra.mxu0 %v1111
    %v1411 = vpop.f32.mrf.mxu0
    %v1412 = vadd.f32 %v1330, %v1411
    %1413 = vmatmul.f32.gmra.mxu0 %v1114
    %v1414 = vpop.f32.mrf.mxu0
    %v1415 = vadd.f32 %v1333, %v1414
    %1416 = vmatmul.f32.gmra.mxu0 %v1117
    %v1417 = vpop.f32.mrf.mxu0
    %v1418 = vadd.f32 %v1336, %v1417
    %1419 = vmatmul.f32.gmra.mxu0 %v1120
    %v1420 = vpop.f32.mrf.mxu0
    %v1421 = vadd.f32 %v1339, %v1420
    %1422 = vmatmul.f32.gmra.mxu0 %v1123
    %v1423 = vpop.f32.mrf.mxu0
    %v1424 = vadd.f32 %v1342, %v1423
    %1425 = vmatmul.f32.gmra.mxu0 %v1126
    %v1426 = vpop.f32.mrf.mxu0
    %v1427 = vadd.f32 %v1345, %v1426
    %1428 = vdwg.mxu0
    %v1429 = vld [vmem:[#allocation5 + $0x200] sm:$0xff]
    %v1430 = vld [vmem:[#allocation5 + $0x208] sm:$0xff]
    %v1431 = vld [vmem:[#allocation5 + $0x210] sm:$0xff]
    %v1432 = vld [vmem:[#allocation5 + $0x218] sm:$0xff]
    %v1433 = vld [vmem:[#allocation5 + $0x220] sm:$0xff]
    %v1434 = vld [vmem:[#allocation5 + $0x228] sm:$0xff]
    %v1435 = vld [vmem:[#allocation5 + $0x230] sm:$0xff]
    %v1436 = vld [vmem:[#allocation5 + $0x238] sm:$0xff]
    %v1437 = vld [vmem:[#allocation5 + $0x240] sm:$0xff]
    %v1438 = vld [vmem:[#allocation5 + $0x248] sm:$0xff]
    %v1439 = vld [vmem:[#allocation5 + $0x250] sm:$0xff]
    %v1440 = vld [vmem:[#allocation5 + $0x258] sm:$0xff]
    %v1441 = vld [vmem:[#allocation5 + $0x260] sm:$0xff]
    %v1442 = vld [vmem:[#allocation5 + $0x268] sm:$0xff]
    %v1443 = vld [vmem:[#allocation5 + $0x270] sm:$0xff]
    %v1444 = vld [vmem:[#allocation5 + $0x278] sm:$0xff]
    %v1445 = vld [vmem:[#allocation5 + $0x280] sm:$0xff]
    %v1446 = vld [vmem:[#allocation5 + $0x288] sm:$0xff]
    %v1447 = vld [vmem:[#allocation5 + $0x290] sm:$0xff]
    %v1448 = vld [vmem:[#allocation5 + $0x298] sm:$0xff]
    %v1449 = vld [vmem:[#allocation5 + $0x2a0] sm:$0xff]
    %v1450 = vld [vmem:[#allocation5 + $0x2a8] sm:$0xff]
    %v1451 = vld [vmem:[#allocation5 + $0x2b0] sm:$0xff]
    %v1452 = vld [vmem:[#allocation5 + $0x2b8] sm:$0xff]
    %v1453 = vld [vmem:[#allocation5 + $0x2c0] sm:$0xff]
    %v1454 = vld [vmem:[#allocation5 + $0x2c8] sm:$0xff]
    %v1455 = vld [vmem:[#allocation5 + $0x2d0] sm:$0xff]
    %v1456 = vld [vmem:[#allocation5 + $0x2d8] sm:$0xff]
    %v1457 = vld [vmem:[#allocation5 + $0x2e0] sm:$0xff]
    %v1458 = vld [vmem:[#allocation5 + $0x2e8] sm:$0xff]
    %v1459 = vld [vmem:[#allocation5 + $0x2f0] sm:$0xff]
    %v1460 = vld [vmem:[#allocation5 + $0x2f8] sm:$0xff]
    %1461 = vmatpush.msra.mxu0 %v1459
    %1462 = vmatpush.msra.mxu0 %v1457
    %1463 = vmatpush.msra.mxu0 %v1455
    %1464 = vmatpush.msra.mxu0 %v1453
    %1465 = vmatpush.msra.mxu0 %v1451
    %1466 = vmatpush.msra.mxu0 %v1449
    %1467 = vmatpush.msra.mxu0 %v1447
    %1468 = vmatpush.msra.mxu0 %v1445
    %1469 = vmatpush.msra.mxu0 %v1443
    %1470 = vmatpush.msra.mxu0 %v1441
    %1471 = vmatpush.msra.mxu0 %v1439
    %1472 = vmatpush.msra.mxu0 %v1437
    %1473 = vmatpush.msra.mxu0 %v1435
    %1474 = vmatpush.msra.mxu0 %v1433
    %1475 = vmatpush.msra.mxu0 %v1431
    %1476 = vmatpush.msra.mxu0 %v1429
    %1477 = vmatmul.f32.gmra.mxu0 %v1178
    %v1478 = vpop.f32.mrf.mxu0
    %v1479 = vadd.f32 0.0, %v1478
    %1480 = vmatmul.f32.gmra.mxu0 %v1181
    %v1481 = vpop.f32.mrf.mxu0
    %v1482 = vadd.f32 0.0, %v1481
    %1483 = vmatmul.f32.gmra.mxu0 %v1184
    %v1484 = vpop.f32.mrf.mxu0
    %v1485 = vadd.f32 0.0, %v1484
    %1486 = vmatmul.f32.gmra.mxu0 %v1187
    %v1487 = vpop.f32.mrf.mxu0
    %v1488 = vadd.f32 0.0, %v1487
    %1489 = vmatmul.f32.gmra.mxu0 %v1190
    %v1490 = vpop.f32.mrf.mxu0
    %v1491 = vadd.f32 0.0, %v1490
    %1492 = vmatmul.f32.gmra.mxu0 %v1193
    %v1493 = vpop.f32.mrf.mxu0
    %v1494 = vadd.f32 0.0, %v1493
    %1495 = vmatmul.f32.gmra.mxu0 %v1196
    %v1496 = vpop.f32.mrf.mxu0
    %v1497 = vadd.f32 0.0, %v1496
    %1498 = vmatmul.f32.gmra.mxu0 %v1199
    %v1499 = vpop.f32.mrf.mxu0
    %v1500 = vadd.f32 0.0, %v1499
    %1501 = vdwg.mxu0
    %1502 = vmatpush.msra.mxu0 %v1460
    %1503 = vmatpush.msra.mxu0 %v1458
    %1504 = vmatpush.msra.mxu0 %v1456
    %1505 = vmatpush.msra.mxu0 %v1454
    %1506 = vmatpush.msra.mxu0 %v1452
    %1507 = vmatpush.msra.mxu0 %v1450
    %1508 = vmatpush.msra.mxu0 %v1448
    %1509 = vmatpush.msra.mxu0 %v1446
    %1510 = vmatpush.msra.mxu0 %v1444
    %1511 = vmatpush.msra.mxu0 %v1442
    %1512 = vmatpush.msra.mxu0 %v1440
    %1513 = vmatpush.msra.mxu0 %v1438
    %1514 = vmatpush.msra.mxu0 %v1436
    %1515 = vmatpush.msra.mxu0 %v1434
    %1516 = vmatpush.msra.mxu0 %v1432
    %1517 = vmatpush.msra.mxu0 %v1430
    %1518 = vmatmul.f32.gmra.mxu0 %v1178
    %v1519 = vpop.f32.mrf.mxu0
    %v1520 = vadd.f32 0.0, %v1519
    %1521 = vmatmul.f32.gmra.mxu0 %v1181
    %v1522 = vpop.f32.mrf.mxu0
    %v1523 = vadd.f32 0.0, %v1522
    %1524 = vmatmul.f32.gmra.mxu0 %v1184
    %v1525 = vpop.f32.mrf.mxu0
    %v1526 = vadd.f32 0.0, %v1525
    %1527 = vmatmul.f32.gmra.mxu0 %v1187
    %v1528 = vpop.f32.mrf.mxu0
    %v1529 = vadd.f32 0.0, %v1528
    %1530 = vmatmul.f32.gmra.mxu0 %v1190
    %v1531 = vpop.f32.mrf.mxu0
    %v1532 = vadd.f32 0.0, %v1531
    %1533 = vmatmul.f32.gmra.mxu0 %v1193
    %v1534 = vpop.f32.mrf.mxu0
    %v1535 = vadd.f32 0.0, %v1534
    %1536 = vmatmul.f32.gmra.mxu0 %v1196
    %v1537 = vpop.f32.mrf.mxu0
    %v1538 = vadd.f32 0.0, %v1537
    %1539 = vmatmul.f32.gmra.mxu0 %v1199
    %v1540 = vpop.f32.mrf.mxu0
    %v1541 = vadd.f32 0.0, %v1540
    %1542 = vdwg.mxu0
    %v1543 = vadd.f32 %v1365, %v1479
    %v1544 = vadd.f32 %v1406, %v1520
    %v1545 = vadd.f32 %v1368, %v1482
    %v1546 = vadd.f32 %v1409, %v1523
    %v1547 = vadd.f32 %v1371, %v1485
    %v1548 = vadd.f32 %v1412, %v1526
    %v1549 = vadd.f32 %v1374, %v1488
    %v1550 = vadd.f32 %v1415, %v1529
    %v1551 = vadd.f32 %v1377, %v1491
    %v1552 = vadd.f32 %v1418, %v1532
    %v1553 = vadd.f32 %v1380, %v1494
    %v1554 = vadd.f32 %v1421, %v1535
    %v1555 = vadd.f32 %v1383, %v1497
    %v1556 = vadd.f32 %v1424, %v1538
    %v1557 = vadd.f32 %v1386, %v1500
    %v1558 = vadd.f32 %v1427, %v1541
    %v1559 = vmax.f32 %v1543, %v1544
    %v1560 = vmax.f32 %v1545, %v1546
    %v1561 = vmax.f32 %v1547, %v1548
    %v1562 = vmax.f32 %v1549, %v1550
    %v1563 = vmax.f32 %v1551, %v1552
    %v1564 = vmax.f32 %v1553, %v1554
    %v1565 = vmax.f32 %v1555, %v1556
    %v1566 = vmax.f32 %v1557, %v1558
    %v1567 = vld [vmem:[%s6] sm:$0x1]
    %v1569 = vperm.slane %v1567, 0
    %v1571 = vadd.f32 %v1559, %v1569
    %v1572 = vadd.f32 %v1560, %v1569
    %v1573 = vadd.f32 %v1561, %v1569
    %v1574 = vadd.f32 %v1562, %v1569
    %v1575 = vadd.f32 %v1563, %v1569
    %v1576 = vadd.f32 %v1564, %v1569
    %v1577 = vadd.f32 %v1565, %v1569
    %v1578 = vadd.f32 %v1566, %v1569
    %v1579 = vmax.f32 %v1571, 0.0
    %v1580 = vmax.f32 %v1572, 0.0
    %v1581 = vmax.f32 %v1573, 0.0
    %v1582 = vmax.f32 %v1574, 0.0
    %v1583 = vmax.f32 %v1575, 0.0
    %v1584 = vmax.f32 %v1576, 0.0
    %v1585 = vmax.f32 %v1577, 0.0
    %v1586 = vmax.f32 %v1578, 0.0
    %v1587 = vld [vmem:[#allocation8] sm:$0xff]
    %v1588 = vld [vmem:[#allocation8 + $0x8] sm:$0xff]
    %v1589 = vld [vmem:[#allocation8 + $0x10] sm:$0xff]
    %v1590 = vld [vmem:[#allocation8 + $0x18] sm:$0xff]
    %v1592 = vsel %vm1062, %v1587, 0
    %v1595 = vsel %vm1062, %v1588, 0
    %v1598 = vsel %vm1062, %v1589, 0
    %v1601 = vsel %vm1062, %v1590, 0
    %1603 = vmatpush.msra.mxu0 0.0
    %1604 = vmatpush.msra.mxu0 0.0
    %1605 = vmatpush.msra.mxu0 0.0
    %1606 = vmatpush.msra.mxu0 0.0
    %1607 = vmatpush.msra.mxu0 0.0
    %1608 = vmatpush.msra.mxu0 0.0
    %1609 = vmatpush.msra.mxu0 0.0
    %1610 = vmatpush.msra.mxu0 0.0
    %1611 = vmatpush.msra.mxu0 %v1586
    %1612 = vmatpush.msra.mxu0 %v1585
    %1613 = vmatpush.msra.mxu0 %v1584
    %1614 = vmatpush.msra.mxu0 %v1583
    %1615 = vmatpush.msra.mxu0 %v1582
    %1616 = vmatpush.msra.mxu0 %v1581
    %1617 = vmatpush.msra.mxu0 %v1580
    %1618 = vmatpush.msra.mxu0 %v1579
    %1619 = vmatmul.f32.gmra.mxu0 %v1592
    %v1620 = vpop.f32.mrf.mxu0
    %v1621 = vadd.f32 0.0, %v1620
    %1622 = vmatmul.f32.gmra.mxu0 %v1595
    %v1623 = vpop.f32.mrf.mxu0
    %v1624 = vadd.f32 0.0, %v1623
    %1625 = vmatmul.f32.gmra.mxu0 %v1598
    %v1626 = vpop.f32.mrf.mxu0
    %v1627 = vadd.f32 0.0, %v1626
    %1628 = vmatmul.f32.gmra.mxu0 %v1601
    %v1629 = vpop.f32.mrf.mxu0
    %v1630 = vadd.f32 0.0, %v1629
    %1631 = vdwg.mxu0
    %v1632 = vld [vmem:[#allocation8 + $0x20] sm:$0xff]
    %v1633 = vld [vmem:[#allocation8 + $0x28] sm:$0xff]
    %v1634 = vld [vmem:[#allocation8 + $0x30] sm:$0xff]
    %v1635 = vld [vmem:[#allocation8 + $0x38] sm:$0xff]
    %v1637 = vsel %vm1062, %v1632, 0
    %v1640 = vsel %vm1062, %v1633, 0
    %v1643 = vsel %vm1062, %v1634, 0
    %v1646 = vsel %vm1062, %v1635, 0
    %1648 = vmatpush.msra.mxu0 0.0
    %1649 = vmatpush.msra.mxu0 0.0
    %1650 = vmatpush.msra.mxu0 0.0
    %1651 = vmatpush.msra.mxu0 0.0
    %1652 = vmatpush.msra.mxu0 0.0
    %1653 = vmatpush.msra.mxu0 0.0
    %1654 = vmatpush.msra.mxu0 0.0
    %1655 = vmatpush.msra.mxu0 0.0
    %1656 = vmatpush.msra.mxu0 %v1586
    %1657 = vmatpush.msra.mxu0 %v1585
    %1658 = vmatpush.msra.mxu0 %v1584
    %1659 = vmatpush.msra.mxu0 %v1583
    %1660 = vmatpush.msra.mxu0 %v1582
    %1661 = vmatpush.msra.mxu0 %v1581
    %1662 = vmatpush.msra.mxu0 %v1580
    %1663 = vmatpush.msra.mxu0 %v1579
    %1664 = vmatmul.f32.gmra.mxu0 %v1637
    %v1665 = vpop.f32.mrf.mxu0
    %v1666 = vadd.f32 0.0, %v1665
    %1667 = vmatmul.f32.gmra.mxu0 %v1640
    %v1668 = vpop.f32.mrf.mxu0
    %v1669 = vadd.f32 0.0, %v1668
    %1670 = vmatmul.f32.gmra.mxu0 %v1643
    %v1671 = vpop.f32.mrf.mxu0
    %v1672 = vadd.f32 0.0, %v1671
    %1673 = vmatmul.f32.gmra.mxu0 %v1646
    %v1674 = vpop.f32.mrf.mxu0
    %v1675 = vadd.f32 0.0, %v1674
    %1676 = vdwg.mxu0
    %v1677 = vmax.f32 %v1621, %v1666
    %v1678 = vmax.f32 %v1624, %v1669
    %v1679 = vmax.f32 %v1627, %v1672
    %v1680 = vmax.f32 %v1630, %v1675
    %v1681 = vld [vmem:[#allocation10] sm:$0xff]
    %v1682 = vld [vmem:[#allocation10 + $0x8] sm:$0xff]
    %v1683 = vld [vmem:[#allocation10 + $0x10] sm:$0xff]
    %v1684 = vld [vmem:[#allocation10 + $0x18] sm:$0xff]
    %v1685 = vld [vmem:[#allocation10 + $0x20] sm:$0xff]
    %v1686 = vld [vmem:[#allocation10 + $0x28] sm:$0xff]
    %v1687 = vld [vmem:[#allocation10 + $0x30] sm:$0xff]
    %v1688 = vld [vmem:[#allocation10 + $0x38] sm:$0xff]
    %v1689 = vld [vmem:[#allocation10 + $0x40] sm:$0xff]
    %v1690 = vld [vmem:[#allocation10 + $0x48] sm:$0xff]
    %v1691 = vld [vmem:[#allocation10 + $0x50] sm:$0xff]
    %v1692 = vld [vmem:[#allocation10 + $0x58] sm:$0xff]
    %v1693 = vld [vmem:[#allocation10 + $0x60] sm:$0xff]
    %v1694 = vld [vmem:[#allocation10 + $0x68] sm:$0xff]
    %v1695 = vld [vmem:[#allocation10 + $0x70] sm:$0xff]
    %v1696 = vld [vmem:[#allocation10 + $0x78] sm:$0xff]
    %v1697 = vld [vmem:[#allocation10 + $0x80] sm:$0xff]
    %v1698 = vld [vmem:[#allocation10 + $0x88] sm:$0xff]
    %v1699 = vld [vmem:[#allocation10 + $0x90] sm:$0xff]
    %v1700 = vld [vmem:[#allocation10 + $0x98] sm:$0xff]
    %v1701 = vld [vmem:[#allocation10 + $0xa0] sm:$0xff]
    %v1702 = vld [vmem:[#allocation10 + $0xa8] sm:$0xff]
    %v1703 = vld [vmem:[#allocation10 + $0xb0] sm:$0xff]
    %v1704 = vld [vmem:[#allocation10 + $0xb8] sm:$0xff]
    %v1705 = vld [vmem:[#allocation10 + $0xc0] sm:$0xff]
    %v1706 = vld [vmem:[#allocation10 + $0xc8] sm:$0xff]
    %v1707 = vld [vmem:[#allocation10 + $0xd0] sm:$0xff]
    %v1708 = vld [vmem:[#allocation10 + $0xd8] sm:$0xff]
    %v1709 = vld [vmem:[#allocation10 + $0xe0] sm:$0xff]
    %v1710 = vld [vmem:[#allocation10 + $0xe8] sm:$0xff]
    %v1711 = vld [vmem:[#allocation10 + $0xf0] sm:$0xff]
    %v1712 = vld [vmem:[#allocation10 + $0xf8] sm:$0xff]
    %1713 = vmatpush.msra.mxu0 %v1712
    %1714 = vmatpush.msra.mxu0 %v1711
    %1715 = vmatpush.msra.mxu0 %v1710
    %1716 = vmatpush.msra.mxu0 %v1709
    %1717 = vmatpush.msra.mxu0 %v1708
    %1718 = vmatpush.msra.mxu0 %v1707
    %1719 = vmatpush.msra.mxu0 %v1706
    %1720 = vmatpush.msra.mxu0 %v1705
    %1721 = vmatpush.msra.mxu0 %v1704
    %1722 = vmatpush.msra.mxu0 %v1703
    %1723 = vmatpush.msra.mxu0 %v1702
    %1724 = vmatpush.msra.mxu0 %v1701
    %1725 = vmatpush.msra.mxu0 %v1700
    %1726 = vmatpush.msra.mxu0 %v1699
    %1727 = vmatpush.msra.mxu0 %v1698
    %1728 = vmatpush.msra.mxu0 %v1697
    %1729 = vmatmul.f32.gmra.mxu0 %v1678
    %v1730 = vpop.f32.mrf.mxu0
    %v1731 = vadd.f32 0.0, %v1730
    %1732 = vdwg.mxu0
    %1733 = vmatpush.msra.mxu0 %v1696
    %1734 = vmatpush.msra.mxu0 %v1695
    %1735 = vmatpush.msra.mxu0 %v1694
    %1736 = vmatpush.msra.mxu0 %v1693
    %1737 = vmatpush.msra.mxu0 %v1692
    %1738 = vmatpush.msra.mxu0 %v1691
    %1739 = vmatpush.msra.mxu0 %v1690
    %1740 = vmatpush.msra.mxu0 %v1689
    %1741 = vmatpush.msra.mxu0 %v1688
    %1742 = vmatpush.msra.mxu0 %v1687
    %1743 = vmatpush.msra.mxu0 %v1686
    %1744 = vmatpush.msra.mxu0 %v1685
    %1745 = vmatpush.msra.mxu0 %v1684
    %1746 = vmatpush.msra.mxu0 %v1683
    %1747 = vmatpush.msra.mxu0 %v1682
    %1748 = vmatpush.msra.mxu0 %v1681
    %1749 = vmatmul.f32.gmra.mxu0 %v1677
    %v1750 = vpop.f32.mrf.mxu0
    %v1751 = vadd.f32 %v1731, %v1750
    %1752 = vdwg.mxu0
    %v1753 = vld [vmem:[#allocation10 + $0x100] sm:$0xff]
    %v1754 = vld [vmem:[#allocation10 + $0x108] sm:$0xff]
    %v1755 = vld [vmem:[#allocation10 + $0x110] sm:$0xff]
    %v1756 = vld [vmem:[#allocation10 + $0x118] sm:$0xff]
    %v1757 = vld [vmem:[#allocation10 + $0x120] sm:$0xff]
    %v1758 = vld [vmem:[#allocation10 + $0x128] sm:$0xff]
    %v1759 = vld [vmem:[#allocation10 + $0x130] sm:$0xff]
    %v1760 = vld [vmem:[#allocation10 + $0x138] sm:$0xff]
    %v1761 = vld [vmem:[#allocation10 + $0x140] sm:$0xff]
    %v1762 = vld [vmem:[#allocation10 + $0x148] sm:$0xff]
    %v1763 = vld [vmem:[#allocation10 + $0x150] sm:$0xff]
    %v1764 = vld [vmem:[#allocation10 + $0x158] sm:$0xff]
    %v1765 = vld [vmem:[#allocation10 + $0x160] sm:$0xff]
    %v1766 = vld [vmem:[#allocation10 + $0x168] sm:$0xff]
    %v1767 = vld [vmem:[#allocation10 + $0x170] sm:$0xff]
    %v1768 = vld [vmem:[#allocation10 + $0x178] sm:$0xff]
    %1769 = vmatpush.msra.mxu0 %v1768
    %1770 = vmatpush.msra.mxu0 %v1767
    %1771 = vmatpush.msra.mxu0 %v1766
    %1772 = vmatpush.msra.mxu0 %v1765
    %1773 = vmatpush.msra.mxu0 %v1764
    %1774 = vmatpush.msra.mxu0 %v1763
    %1775 = vmatpush.msra.mxu0 %v1762
    %1776 = vmatpush.msra.mxu0 %v1761
    %1777 = vmatpush.msra.mxu0 %v1760
    %1778 = vmatpush.msra.mxu0 %v1759
    %1779 = vmatpush.msra.mxu0 %v1758
    %1780 = vmatpush.msra.mxu0 %v1757
    %1781 = vmatpush.msra.mxu0 %v1756
    %1782 = vmatpush.msra.mxu0 %v1755
    %1783 = vmatpush.msra.mxu0 %v1754
    %1784 = vmatpush.msra.mxu0 %v1753
    %1785 = vmatmul.f32.gmra.mxu0 %v1679
    %v1786 = vpop.f32.mrf.mxu0
    %v1787 = vadd.f32 0.0, %v1786
    %1788 = vdwg.mxu0
    %v1789 = vadd.f32 %v1751, %v1787
    %v1790 = vld [vmem:[#allocation10 + $0x180] sm:$0xff]
    %v1791 = vld [vmem:[#allocation10 + $0x188] sm:$0xff]
    %v1792 = vld [vmem:[#allocation10 + $0x190] sm:$0xff]
    %v1793 = vld [vmem:[#allocation10 + $0x198] sm:$0xff]
    %v1794 = vld [vmem:[#allocation10 + $0x1a0] sm:$0xff]
    %v1795 = vld [vmem:[#allocation10 + $0x1a8] sm:$0xff]
    %v1796 = vld [vmem:[#allocation10 + $0x1b0] sm:$0xff]
    %v1797 = vld [vmem:[#allocation10 + $0x1b8] sm:$0xff]
    %v1798 = vld [vmem:[#allocation10 + $0x1c0] sm:$0xff]
    %v1799 = vld [vmem:[#allocation10 + $0x1c8] sm:$0xff]
    %v1800 = vld [vmem:[#allocation10 + $0x1d0] sm:$0xff]
    %v1801 = vld [vmem:[#allocation10 + $0x1d8] sm:$0xff]
    %v1802 = vld [vmem:[#allocation10 + $0x1e0] sm:$0xff]
    %v1803 = vld [vmem:[#allocation10 + $0x1e8] sm:$0xff]
    %v1804 = vld [vmem:[#allocation10 + $0x1f0] sm:$0xff]
    %v1805 = vld [vmem:[#allocation10 + $0x1f8] sm:$0xff]
    %1806 = vmatpush.msra.mxu0 %v1805
    %1807 = vmatpush.msra.mxu0 %v1804
    %1808 = vmatpush.msra.mxu0 %v1803
    %1809 = vmatpush.msra.mxu0 %v1802
    %1810 = vmatpush.msra.mxu0 %v1801
    %1811 = vmatpush.msra.mxu0 %v1800
    %1812 = vmatpush.msra.mxu0 %v1799
    %1813 = vmatpush.msra.mxu0 %v1798
    %1814 = vmatpush.msra.mxu0 %v1797
    %1815 = vmatpush.msra.mxu0 %v1796
    %1816 = vmatpush.msra.mxu0 %v1795
    %1817 = vmatpush.msra.mxu0 %v1794
    %1818 = vmatpush.msra.mxu0 %v1793
    %1819 = vmatpush.msra.mxu0 %v1792
    %1820 = vmatpush.msra.mxu0 %v1791
    %1821 = vmatpush.msra.mxu0 %v1790
    %1822 = vmatmul.f32.gmra.mxu0 %v1680
    %v1823 = vpop.f32.mrf.mxu0
    %v1824 = vadd.f32 0.0, %v1823
    %1825 = vdwg.mxu0
    %v1826 = vadd.f32 %v1789, %v1824
    %v1827 = vld [vmem:[%s10] sm:$0x1]
    %v1829 = vperm.slane %v1827, 0
    %v1831 = vadd.f32 %v1826, %v1829
    %v1832 = vmax.f32 %v1831, 0.0
    %v1833 = vld [vmem:[#allocation11] sm:$0xff]
    %v1834 = vld [vmem:[#allocation11 + $0x8] sm:$0xff]
    %v1835 = vld [vmem:[#allocation11 + $0x10] sm:$0xff]
    %v1836 = vld [vmem:[#allocation11 + $0x18] sm:$0xff]
    %v1837 = vld [vmem:[#allocation11 + $0x20] sm:$0xff]
    %v1838 = vld [vmem:[#allocation11 + $0x28] sm:$0xff]
    %v1839 = vld [vmem:[#allocation11 + $0x30] sm:$0xff]
    %v1840 = vld [vmem:[#allocation11 + $0x38] sm:$0xff]
    %v1841 = vld [vmem:[#allocation11 + $0x40] sm:$0xff]
    %v1842 = vld [vmem:[#allocation11 + $0x48] sm:$0xff]
    %v1843 = vld [vmem:[#allocation11 + $0x50] sm:$0xff]
    %v1844 = vld [vmem:[#allocation11 + $0x58] sm:$0xff]
    %v1845 = vld [vmem:[#allocation11 + $0x60] sm:$0xff]
    %v1846 = vld [vmem:[#allocation11 + $0x68] sm:$0xff]
    %v1847 = vld [vmem:[#allocation11 + $0x70] sm:$0xff]
    %v1848 = vld [vmem:[#allocation11 + $0x78] sm:$0xff]
    %v1849 = vld [vmem:[%s12] sm:$0x1]
    %v1851 = vperm.slane %v1849, 0
    %1853 = vmatpush.msra.mxu0 %v1848
    %1854 = vmatpush.msra.mxu0 %v1847
    %1855 = vmatpush.msra.mxu0 %v1846
    %1856 = vmatpush.msra.mxu0 %v1845
    %1857 = vmatpush.msra.mxu0 %v1844
    %1858 = vmatpush.msra.mxu0 %v1843
    %1859 = vmatpush.msra.mxu0 %v1842
    %1860 = vmatpush.msra.mxu0 %v1841
    %1861 = vmatpush.msra.mxu0 %v1840
    %1862 = vmatpush.msra.mxu0 %v1839
    %1863 = vmatpush.msra.mxu0 %v1838
    %1864 = vmatpush.msra.mxu0 %v1837
    %1865 = vmatpush.msra.mxu0 %v1836
    %1866 = vmatpush.msra.mxu0 %v1835
    %1867 = vmatpush.msra.mxu0 %v1834
    %1868 = vmatpush.msra.mxu0 %v1833
    %1869 = vmatmul.f32.gmra.mxu0 %v1832
    %v1870 = vpop.f32.mrf.mxu0
    %v1871 = vadd.f32 %v1851, %v1870
    %1872 = vdwg.mxu0
    %1873 = vst [vmem:[#allocation13] sm:$0xff] %v1871
    // Predicated region
    $region78: #{tpu_custom_call.1} parent=1 // pred_check
      _
    $region79: #{tpu_custom_call.1} parent=1 // pred_check_branch
      %1875 = sbr.rel (0) target = $region81
    $region80: #{tpu_custom_call.1} parent=1 // pred_region
      %1877 = vsyncadd [#allocation4], 0
      %s1879 = sshll.u32 [#allocation13], 4
      %s1880 = int_to_ptr.vmem [resolvable:$true] %s1879
      %s1881 = sshll.u32 %s13, 4
      %s1882 = int_to_ptr.hbm [resolvable:$true] %s1881
      %1884 = dma.vmem_to_hbm [thread:$0]  %s1880, 128, %s1882, [#allocation4]
    $region81: #{tpu_custom_call.1} parent=1 // pred_fallthru
      _
    // Predicated region
    $region82: #{tpu_custom_call.1} parent=1 // pred_check
      _
    $region83: #{tpu_custom_call.1} parent=1 // pred_check_branch
      %1886 = sbr.rel (0) target = $region85
    $region84: #{tpu_custom_call.1} parent=1 // pred_region
      %1888 = dma.done [#allocation4], 128
    $region85: #{tpu_custom_call.1} parent=1 // pred_fallthru
      _
    %1889 = vsyncpa [#allocation3], 1
    %1890 = vsyncpa [#allocation6], 1
    %1891 = vsyncpa [#allocation9], 1
    %1892 = vsyncpa [#allocation12], 1
    %1893 = vsyncpa [#allocation4], 1

</llo_original>
